<compile_context>
chip_gen: v7x
topology: tpu7x:2x2x1
jax: 0.10.0
libtpu: 0.0.40
codegen_flags: <defaults>
</compile_context>

<pallas_src>
import functools

import jax
import jax.numpy as jnp
from jax import lax
from jax.experimental import pallas as pl
from jax.experimental.pallas import tpu as pltpu

EPS = 1e-5
N_IN = 3
N_OUT = 10
N_OUT_PAD = 16          # output features padded 10 -> 16 (sublane multiple)
N_HIDDEN = 10           # number of (Linear + BN + ReLU) blocks
HIDDEN = 128            # n_hidden_size


def _bn_relu(y, gamma, beta, inv_b, ones_rows, use_mxu_stats):
    """Fused training-mode BatchNorm1d + ReLU (batch stats, biased variance).

    Pre-BN Linear biases are dropped by the caller: a per-channel constant
    cancels exactly in (y - mean), so the result is unchanged.

    With `use_mxu_stats` the batch reductions run as ones @ y on the MXU
    (which has slack on the bf16 path) instead of VPU sublane reductions,
    removing ~2 VALU ops/element/layer from the binding slot.
    """
    if use_mxu_stats:
        s1 = jnp.dot(ones_rows, y, preferred_element_type=jnp.float32)[0:1, :]
        s2 = jnp.dot(ones_rows, y * y,
                     preferred_element_type=jnp.float32)[0:1, :]
    else:
        s1 = jnp.sum(y, axis=0, keepdims=True)        # [1, H]
        s2 = jnp.sum(y * y, axis=0, keepdims=True)    # [1, H]
    mean = s1 * inv_b
    # Single-pass variance; fine here since pre-BN biases are removed and the
    # activations are O(1).
    # TODO(synk): two-pass / Welford variance if inputs are less benign
    #   (E[y^2]-mean^2 cancels catastrophically when |mean| >> std).
    var = s2 * inv_b - mean * mean
    scale = gamma * lax.rsqrt(var + EPS)               # [1, H]
    shift = beta - mean * scale                        # [1, H]
    return jnp.maximum(y * scale + shift, 0.0)         # single VPU pass


def three_body_mlp_kernel(x_ref, w0_ref, w_ref, g_ref, be_ref, wo_ref, bo_ref,
                          o_ref, *, unroll):
    """Whole MLP in one kernel; everything resident in VMEM.

    x_ref  : [B, 3]               f32 input (unpadded)
    w0_ref : [3, 128]             f32 layer-0 weight (x @ W convention), VPU FMAs
    w_ref  : [9, 128, 128]        hidden weights, layers 1..9 (bf16 default / f32)
    g_ref  : [10, 1, 128]         BN gamma (f32)
    be_ref : [10, 1, 128]         BN beta  (f32)
    wo_ref : [16, 128]            output weight, transposed + padded 10 -> 16
    bo_ref : [16, 1]              output bias, padded (f32)
    o_ref  : [16, B]              transposed output (batch on the lane axis)
    """
    B = x_ref.shape[0]
    inv_b = 1.0 / B
    mxu_dtype = w_ref.dtype
    # Offload BN stats to the MXU only where it helps: bf16 path (VALU-bound,
    # MXU has slack) and a batch big enough for lane-aligned reductions.
    use_mxu_stats = (mxu_dtype == jnp.bfloat16) and (B >= 128)
    # Hoisted once (JAX does not CSE broadcast_in_dim inside loops).
    ones_rows = jnp.ones((8, B), jnp.float32) if use_mxu_stats else None

    bn_relu = functools.partial(_bn_relu, inv_b=inv_b, ones_rows=ones_rows,
                                use_mxu_stats=use_mxu_stats)

    # ---- Layer 0: Linear(3, 128) as three broadcast FMAs on the VPU (f32).
    #      No pre-BN bias (cancels); no padded MXU matmul.
    w0 = w0_ref[...]
    y = (x_ref[:, 0:1] * w0[0:1, :]
         + x_ref[:, 1:2] * w0[1:2, :]
         + x_ref[:, 2:3] * w0[2:3, :])
    h = bn_relu(y, g_ref[0], be_ref[0])

    # ---- Layers 1..9: Linear(128, 128) on the MXU (bias dropped: cancels in BN).
    def layer(l, h):
        y = jnp.dot(h.astype(mxu_dtype), w_ref[l - 1],
                    preferred_element_type=jnp.float32)
        return bn_relu(y, g_ref[l], be_ref[l])

    if unroll:
        # Small-B / latency-bound regime: static unroll lets the scheduler
        # interleave consecutive layers.
        for l in range(1, N_HIDDEN):
            h = layer(l, h)
    else:
        # Large-B regime: bound live ranges / VMEM high-water mark (weights are
        # already VMEM-resident, so there is no DMA the unroll would hide).
        h = lax.fori_loop(1, N_HIDDEN, layer, h)

    # ---- Output layer: Linear(128, 10) stored transposed as [16, B] so the
    #      HBM writeback is 64 B/row instead of 512 B/row (lane-dense for
    #      B >= 128; features padded 10 -> 16 on the sublane axis).
    h_mm = h.astype(mxu_dtype)
    o_ref[...] = (jnp.dot(wo_ref[...], h_mm.T,
                          preferred_element_type=jnp.float32) + bo_ref[...])


def _vmem_capacity_bytes():
    try:
        info = pltpu.get_tpu_info()
        cap = getattr(info, "vmem_capacity_bytes", None)
        if cap:
            return int(cap)
    except Exception:
        pass
    return 64 << 20  # conservative: v7x per-TensorCore VMEM


@functools.partial(jax.jit, static_argnames=("unroll",))
def _forward_jit(x, kernel_params, unroll):
    w0, w_hid, g, be, wo_t, bo = kernel_params
    B = x.shape[0]
    args = (x, w0, w_hid, g, be, wo_t, bo)

    # VMEM budget: double-buffered operands + output + in-kernel temporaries
    # (y, y*y, h, bf16 casts), clamped below the queried physical capacity.
    arg_bytes = sum(a.size * a.dtype.itemsize for a in args)
    out_bytes = N_OUT_PAD * B * 4
    tmp_bytes = 8 * B * HIDDEN * 4
    needed = 2 * arg_bytes + 2 * out_bytes + tmp_bytes + (2 << 20)
    cap = _vmem_capacity_bytes()
    vmem_limit = int(min(max(needed, 16 << 20), int(0.9 * cap)))

    vmem = pl.BlockSpec(memory_space=pltpu.MemorySpace.VMEM)
    out_t = pl.pallas_call(
        functools.partial(three_body_mlp_kernel, unroll=unroll),
        out_shape=jax.ShapeDtypeStruct((N_OUT_PAD, B), jnp.float32),
        in_specs=[vmem] * len(args),
        out_specs=vmem,
        compiler_params=pltpu.CompilerParams(vmem_limit_bytes=vmem_limit),
    )(*args)
    # [16, B] -> [B, 10]: touches 8x less HBM than slicing a [B, 128] output.
    return out_t[:N_OUT, :].T


def three_body_mlp(x, kernel_params, unroll=None):
    """x: [B, 3] f32 -> [B, 10] f32.  The weights' dtype selects the MXU path."""
    B = x.shape[0]
    # Training-mode BatchNorm needs B >= 2 (PyTorch errors; B=1 -> var=0 blow-up).
    assert B >= 2, "training-mode BatchNorm requires batch size >= 2"
    if unroll is None:
        unroll = B <= 2048
    return _forward_jit(x, kernel_params, unroll=unroll)


def init_torch_like_params(key):
    """Deterministic synthetic parameters matching ThreeBodyMLP (f32 master copy).

    Weights are stored as [in, out] (torch Linear.weight transposed), biases as
    [1, out].  Hidden-layer Linear biases are generated (as in PyTorch) even
    though they cancel under training-mode BN: the reference uses them, the
    kernel drops them.
    """
    n_keys = 2 * N_HIDDEN + 2
    keys = jax.random.split(key, n_keys)
    ki = iter(range(n_keys))

    w_list, b_list, g_list, be_list = [], [], [], []
    for l in range(N_HIDDEN):
        in_dim = N_IN if l == 0 else HIDDEN
        w_list.append(0.1 * jax.random.normal(keys[next(ki)], (in_dim, HIDDEN),
                                              jnp.float32))
        b_list.append(0.1 * jax.random.normal(keys[next(ki)], (1, HIDDEN),
                                              jnp.float32))
        g_list.append(jnp.ones((1, HIDDEN), jnp.float32))    # BN weight default
        be_list.append(jnp.zeros((1, HIDDEN), jnp.float32))  # BN bias default

    w_out = 0.1 * jax.random.normal(keys[next(ki)], (HIDDEN, N_OUT), jnp.float32)
    b_out = 0.1 * jax.random.normal(keys[next(ki)], (1, N_OUT), jnp.float32)
    return (w_list, b_list, g_list, be_list, w_out, b_out)


def pack_kernel_params(torch_params, matmul_dtype=jnp.bfloat16):
    """One-time pack/pre-cast (outside the hot path): no per-call astype/pad."""
    w_list, _b_list, g_list, be_list, w_out, b_out = torch_params
    w0 = w_list[0]                                           # [3,128] f32 (VPU layer 0)
    w_hid = jnp.stack(w_list[1:]).astype(matmul_dtype)       # [9,128,128]
    g = jnp.stack(g_list)                                    # [10,1,128] f32
    be = jnp.stack(be_list)                                  # [10,1,128] f32
    # Output layer stored transposed + padded 10 -> 16 on the feature axis.
    wo_t = jnp.zeros((N_OUT_PAD, HIDDEN), jnp.float32).at[:N_OUT, :].set(w_out.T)
    wo_t = wo_t.astype(matmul_dtype)
    bo = jnp.zeros((N_OUT_PAD, 1), jnp.float32).at[:N_OUT, 0].set(b_out[0])
    return (w0, w_hid, g, be, wo_t, bo)


def reference_forward(x, torch_params, matmul_dtype=jnp.float32):
    """Pure-JAX mirror of the PyTorch training-mode forward: Linear biases
    included, two-pass BN.  Layer 0 is written in the same exact f32
    broadcast-FMA form as nn.Linear(3,128) / the kernel so the f32 comparison
    stays tight; hidden/output matmuls use `matmul_dtype`."""
    w_list, b_list, g_list, be_list, w_out, b_out = torch_params

    def bn_relu(y, gamma, beta):
        mean = y.mean(axis=0, keepdims=True)
        var = ((y - mean) ** 2).mean(axis=0, keepdims=True)
        return jnp.maximum((y - mean) * lax.rsqrt(var + EPS) * gamma + beta, 0.0)

    w0 = w_list[0]
    y = (x[:, 0:1] * w0[0:1, :] + x[:, 1:2] * w0[1:2, :]
         + x[:, 2:3] * w0[2:3, :] + b_list[0])
    h = bn_relu(y, g_list[0], be_list[0])
    for l in range(1, N_HIDDEN):
        y = jnp.dot(h.astype(matmul_dtype), w_list[l].astype(matmul_dtype),
                    preferred_element_type=jnp.float32) + b_list[l]
        h = bn_relu(y, g_list[l], be_list[l])
    return jnp.dot(h.astype(matmul_dtype), w_out.astype(matmul_dtype),
                   preferred_element_type=jnp.float32) + b_out


if __name__ == "__main__":
    key = jax.random.PRNGKey(0)
    k_param, k_x1, k_x2 = jax.random.split(key, 3)

    torch_params = init_torch_like_params(k_param)
    # Recommended default: weights pre-cast ONCE to bf16 for the MXU.
    params_bf16 = pack_kernel_params(torch_params, jnp.bfloat16)
    # Gated exact-semantics path: f32 weights (multi-pass MXU emulation).
    params_f32 = pack_kernel_params(torch_params, jnp.float32)

    # --- Small batch (latency-bound regime): unrolled layers, VPU BN stats.
    x_small = jax.random.normal(k_x1, (16, N_IN), jnp.float32)

    out_bf16 = jax.block_until_ready(three_body_mlp(x_small, params_bf16))
    assert out_bf16.shape == (16, N_OUT)
    assert bool(jnp.isfinite(out_bf16).all())
    ref_bf16 = reference_forward(x_small, torch_params, jnp.bfloat16)
    assert jnp.allclose(out_bf16, ref_bf16, atol=1e-1, rtol=1e-1), \
        float(jnp.abs(out_bf16 - ref_bf16).max())

    # Exact-semantics gate: f32 kernel vs PyTorch-style f32 reference (which
    # keeps the hidden biases the kernel drops -- they cancel under BN).
    out_f32 = jax.block_until_ready(three_body_mlp(x_small, params_f32))
    ref_f32 = reference_forward(x_small, torch_params, jnp.float32)
    assert jnp.allclose(out_f32, ref_f32, atol=1e-4, rtol=1e-4), \
        float(jnp.abs(out_f32 - ref_f32).max())

    # --- Larger batch: exercises the MXU-offloaded BN reductions, the
    #     lane-dense transposed output store, and the fori_loop layer path.
    x_big = jax.random.normal(k_x2, (128, N_IN), jnp.float32)
    out_big = jax.block_until_ready(
        three_body_mlp(x_big, params_bf16, unroll=False))
    assert out_big.shape == (128, N_OUT)
    assert bool(jnp.isfinite(out_big).all())
    ref_big = reference_forward(x_big, torch_params, jnp.bfloat16)
    assert jnp.allclose(out_big, ref_big, atol=1e-1, rtol=1e-1), \
        float(jnp.abs(out_big - ref_big).max())

    print("KERNEL_OK")
</pallas_src>

<mosaic_0001>
module attributes {stable_mosaic.version = 11 : i64} {
  func.func @three_body_mlp_kernel(%arg0: memref<16x3xf32, #tpu.memory_space<vmem>>, %arg1: memref<3x128xf32, #tpu.memory_space<vmem>>, %arg2: memref<9x128x128xbf16, #tpu.memory_space<vmem>>, %arg3: memref<10x1x128xf32, #tpu.memory_space<vmem>>, %arg4: memref<10x1x128xf32, #tpu.memory_space<vmem>>, %arg5: memref<16x128xbf16, #tpu.memory_space<vmem>>, %arg6: memref<16x1xf32, #tpu.memory_space<vmem>>, %arg7: memref<16x16xf32, #tpu.memory_space<vmem>>) attributes {dimension_semantics = [], scalar_prefetch = 0 : i64, scratch_operands = 0 : i64, tpu.core_type = #tpu.core_type<tc>} {
    %c0 = arith.constant 0 : index
    %c0_0 = arith.constant 0 : index
    %0 = vector.load %arg1[%c0, %c0_0] : memref<3x128xf32, #tpu.memory_space<vmem>>, vector<3x128xf32>
    %c0_1 = arith.constant 0 : index
    %c0_2 = arith.constant 0 : index
    %1 = vector.load %arg0[%c0_1, %c0_2] : memref<16x3xf32, #tpu.memory_space<vmem>>, vector<16x1xf32>
    %2 = vector.extract_strided_slice %0 {offsets = [0, 0], sizes = [1, 128], strides = [1, 1]} : vector<3x128xf32> to vector<1x128xf32>
    %3 = vector.broadcast %1 : vector<16x1xf32> to vector<16x128xf32>
    %4 = vector.broadcast %2 : vector<1x128xf32> to vector<16x128xf32>
    %5 = arith.mulf %3, %4 : vector<16x128xf32>
    %c0_3 = arith.constant 0 : index
    %c1 = arith.constant 1 : index
    %6 = vector.load %arg0[%c0_3, %c1] : memref<16x3xf32, #tpu.memory_space<vmem>>, vector<16x1xf32>
    %7 = vector.extract_strided_slice %0 {offsets = [1, 0], sizes = [1, 128], strides = [1, 1]} : vector<3x128xf32> to vector<1x128xf32>
    %8 = vector.broadcast %6 : vector<16x1xf32> to vector<16x128xf32>
    %9 = vector.broadcast %7 : vector<1x128xf32> to vector<16x128xf32>
    %10 = arith.mulf %8, %9 : vector<16x128xf32>
    %11 = arith.addf %5, %10 : vector<16x128xf32>
    %c0_4 = arith.constant 0 : index
    %c2 = arith.constant 2 : index
    %12 = vector.load %arg0[%c0_4, %c2] : memref<16x3xf32, #tpu.memory_space<vmem>>, vector<16x1xf32>
    %13 = vector.extract_strided_slice %0 {offsets = [2, 0], sizes = [1, 128], strides = [1, 1]} : vector<3x128xf32> to vector<1x128xf32>
    %14 = vector.broadcast %12 : vector<16x1xf32> to vector<16x128xf32>
    %15 = vector.broadcast %13 : vector<1x128xf32> to vector<16x128xf32>
    %16 = arith.mulf %14, %15 : vector<16x128xf32>
    %17 = arith.addf %11, %16 : vector<16x128xf32>
    %c0_5 = arith.constant 0 : index
    %c0_6 = arith.constant 0 : index
    %c0_7 = arith.constant 0 : index
    %18 = vector.load %arg3[%c0_5, %c0_6, %c0_7] : memref<10x1x128xf32, #tpu.memory_space<vmem>>, vector<1x1x128xf32>
    %19 = vector.shape_cast %18 : vector<1x1x128xf32> to vector<1x128xf32>
    %c0_8 = arith.constant 0 : index
    %c0_9 = arith.constant 0 : index
    %c0_10 = arith.constant 0 : index
    %20 = vector.load %arg4[%c0_8, %c0_9, %c0_10] : memref<10x1x128xf32, #tpu.memory_space<vmem>>, vector<1x1x128xf32>
    %21 = vector.shape_cast %20 : vector<1x1x128xf32> to vector<1x128xf32>
    %cst = arith.constant dense<0.000000e+00> : vector<128xf32>
    %22 = vector.multi_reduction <add>, %17, %cst [0] : vector<16x128xf32> to vector<128xf32>
    %23 = vector.shape_cast %22 : vector<128xf32> to vector<1x128xf32>
    %24 = arith.mulf %17, %17 : vector<16x128xf32>
    %cst_11 = arith.constant dense<0.000000e+00> : vector<128xf32>
    %25 = vector.multi_reduction <add>, %24, %cst_11 [0] : vector<16x128xf32> to vector<128xf32>
    %26 = vector.shape_cast %25 : vector<128xf32> to vector<1x128xf32>
    %cst_12 = arith.constant 6.250000e-02 : f32
    %27 = vector.broadcast %cst_12 : f32 to vector<1x128xf32>
    %28 = arith.mulf %23, %27 : vector<1x128xf32>
    %cst_13 = arith.constant 6.250000e-02 : f32
    %29 = vector.broadcast %cst_13 : f32 to vector<1x128xf32>
    %30 = arith.mulf %26, %29 : vector<1x128xf32>
    %31 = arith.mulf %28, %28 : vector<1x128xf32>
    %32 = arith.subf %30, %31 : vector<1x128xf32>
    %cst_14 = arith.constant 9.99999974E-6 : f32
    %33 = vector.broadcast %cst_14 : f32 to vector<1x128xf32>
    %34 = arith.addf %32, %33 : vector<1x128xf32>
    %35 = math.rsqrt %34 : vector<1x128xf32>
    %36 = arith.mulf %19, %35 : vector<1x128xf32>
    %37 = arith.mulf %28, %36 : vector<1x128xf32>
    %38 = arith.subf %21, %37 : vector<1x128xf32>
    %39 = vector.broadcast %36 : vector<1x128xf32> to vector<16x128xf32>
    %40 = arith.mulf %17, %39 : vector<16x128xf32>
    %41 = vector.broadcast %38 : vector<1x128xf32> to vector<16x128xf32>
    %42 = arith.addf %40, %41 : vector<16x128xf32>
    %cst_15 = arith.constant 0.000000e+00 : f32
    %43 = vector.broadcast %cst_15 : f32 to vector<16x128xf32>
    %44 = arith.maximumf %42, %43 : vector<16x128xf32>
    %45 = arith.truncf %44 : vector<16x128xf32> to vector<16x128xbf16>
    %c0_16 = arith.constant 0 : index
    %c0_17 = arith.constant 0 : index
    %c0_18 = arith.constant 0 : index
    %46 = vector.load %arg2[%c0_16, %c0_17, %c0_18] : memref<9x128x128xbf16, #tpu.memory_space<vmem>>, vector<1x128x128xbf16>
    %47 = vector.shape_cast %46 : vector<1x128x128xbf16> to vector<128x128xbf16>
    %cst_19 = arith.constant dense<0.000000e+00> : vector<16x128xf32>
    %48 = tpu.matmul %45, %47, %cst_19 {dimension_numbers = #tpu.dot_dimension_numbers<[1], [0], [0], [1], [0, 0, 1, 1], [], []>} : vector<16x128xbf16>, vector<128x128xbf16>, vector<16x128xf32> -> vector<16x128xf32>
    %c1_20 = arith.constant 1 : index
    %c0_21 = arith.constant 0 : index
    %c0_22 = arith.constant 0 : index
    %49 = vector.load %arg3[%c1_20, %c0_21, %c0_22] : memref<10x1x128xf32, #tpu.memory_space<vmem>>, vector<1x1x128xf32>
    %50 = vector.shape_cast %49 : vector<1x1x128xf32> to vector<1x128xf32>
    %c1_23 = arith.constant 1 : index
    %c0_24 = arith.constant 0 : index
    %c0_25 = arith.constant 0 : index
    %51 = vector.load %arg4[%c1_23, %c0_24, %c0_25] : memref<10x1x128xf32, #tpu.memory_space<vmem>>, vector<1x1x128xf32>
    %52 = vector.shape_cast %51 : vector<1x1x128xf32> to vector<1x128xf32>
    %cst_26 = arith.constant dense<0.000000e+00> : vector<128xf32>
    %53 = vector.multi_reduction <add>, %48, %cst_26 [0] : vector<16x128xf32> to vector<128xf32>
    %54 = vector.shape_cast %53 : vector<128xf32> to vector<1x128xf32>
    %55 = arith.mulf %48, %48 : vector<16x128xf32>
    %cst_27 = arith.constant dense<0.000000e+00> : vector<128xf32>
    %56 = vector.multi_reduction <add>, %55, %cst_27 [0] : vector<16x128xf32> to vector<128xf32>
    %57 = vector.shape_cast %56 : vector<128xf32> to vector<1x128xf32>
    %cst_28 = arith.constant 6.250000e-02 : f32
    %58 = vector.broadcast %cst_28 : f32 to vector<1x128xf32>
    %59 = arith.mulf %54, %58 : vector<1x128xf32>
    %cst_29 = arith.constant 6.250000e-02 : f32
    %60 = vector.broadcast %cst_29 : f32 to vector<1x128xf32>
    %61 = arith.mulf %57, %60 : vector<1x128xf32>
    %62 = arith.mulf %59, %59 : vector<1x128xf32>
    %63 = arith.subf %61, %62 : vector<1x128xf32>
    %cst_30 = arith.constant 9.99999974E-6 : f32
    %64 = vector.broadcast %cst_30 : f32 to vector<1x128xf32>
    %65 = arith.addf %63, %64 : vector<1x128xf32>
    %66 = math.rsqrt %65 : vector<1x128xf32>
    %67 = arith.mulf %50, %66 : vector<1x128xf32>
    %68 = arith.mulf %59, %67 : vector<1x128xf32>
    %69 = arith.subf %52, %68 : vector<1x128xf32>
    %70 = vector.broadcast %67 : vector<1x128xf32> to vector<16x128xf32>
    %71 = arith.mulf %48, %70 : vector<16x128xf32>
    %72 = vector.broadcast %69 : vector<1x128xf32> to vector<16x128xf32>
    %73 = arith.addf %71, %72 : vector<16x128xf32>
    %cst_31 = arith.constant 0.000000e+00 : f32
    %74 = vector.broadcast %cst_31 : f32 to vector<16x128xf32>
    %75 = arith.maximumf %73, %74 : vector<16x128xf32>
    %76 = arith.truncf %75 : vector<16x128xf32> to vector<16x128xbf16>
    %c1_32 = arith.constant 1 : index
    %c0_33 = arith.constant 0 : index
    %c0_34 = arith.constant 0 : index
    %77 = vector.load %arg2[%c1_32, %c0_33, %c0_34] : memref<9x128x128xbf16, #tpu.memory_space<vmem>>, vector<1x128x128xbf16>
    %78 = vector.shape_cast %77 : vector<1x128x128xbf16> to vector<128x128xbf16>
    %cst_35 = arith.constant dense<0.000000e+00> : vector<16x128xf32>
    %79 = tpu.matmul %76, %78, %cst_35 {dimension_numbers = #tpu.dot_dimension_numbers<[1], [0], [0], [1], [0, 0, 1, 1], [], []>} : vector<16x128xbf16>, vector<128x128xbf16>, vector<16x128xf32> -> vector<16x128xf32>
    %c2_36 = arith.constant 2 : index
    %c0_37 = arith.constant 0 : index
    %c0_38 = arith.constant 0 : index
    %80 = vector.load %arg3[%c2_36, %c0_37, %c0_38] : memref<10x1x128xf32, #tpu.memory_space<vmem>>, vector<1x1x128xf32>
    %81 = vector.shape_cast %80 : vector<1x1x128xf32> to vector<1x128xf32>
    %c2_39 = arith.constant 2 : index
    %c0_40 = arith.constant 0 : index
    %c0_41 = arith.constant 0 : index
    %82 = vector.load %arg4[%c2_39, %c0_40, %c0_41] : memref<10x1x128xf32, #tpu.memory_space<vmem>>, vector<1x1x128xf32>
    %83 = vector.shape_cast %82 : vector<1x1x128xf32> to vector<1x128xf32>
    %cst_42 = arith.constant dense<0.000000e+00> : vector<128xf32>
    %84 = vector.multi_reduction <add>, %79, %cst_42 [0] : vector<16x128xf32> to vector<128xf32>
    %85 = vector.shape_cast %84 : vector<128xf32> to vector<1x128xf32>
    %86 = arith.mulf %79, %79 : vector<16x128xf32>
    %cst_43 = arith.constant dense<0.000000e+00> : vector<128xf32>
    %87 = vector.multi_reduction <add>, %86, %cst_43 [0] : vector<16x128xf32> to vector<128xf32>
    %88 = vector.shape_cast %87 : vector<128xf32> to vector<1x128xf32>
    %cst_44 = arith.constant 6.250000e-02 : f32
    %89 = vector.broadcast %cst_44 : f32 to vector<1x128xf32>
    %90 = arith.mulf %85, %89 : vector<1x128xf32>
    %cst_45 = arith.constant 6.250000e-02 : f32
    %91 = vector.broadcast %cst_45 : f32 to vector<1x128xf32>
    %92 = arith.mulf %88, %91 : vector<1x128xf32>
    %93 = arith.mulf %90, %90 : vector<1x128xf32>
    %94 = arith.subf %92, %93 : vector<1x128xf32>
    %cst_46 = arith.constant 9.99999974E-6 : f32
    %95 = vector.broadcast %cst_46 : f32 to vector<1x128xf32>
    %96 = arith.addf %94, %95 : vector<1x128xf32>
    %97 = math.rsqrt %96 : vector<1x128xf32>
    %98 = arith.mulf %81, %97 : vector<1x128xf32>
    %99 = arith.mulf %90, %98 : vector<1x128xf32>
    %100 = arith.subf %83, %99 : vector<1x128xf32>
    %101 = vector.broadcast %98 : vector<1x128xf32> to vector<16x128xf32>
    %102 = arith.mulf %79, %101 : vector<16x128xf32>
    %103 = vector.broadcast %100 : vector<1x128xf32> to vector<16x128xf32>
    %104 = arith.addf %102, %103 : vector<16x128xf32>
    %cst_47 = arith.constant 0.000000e+00 : f32
    %105 = vector.broadcast %cst_47 : f32 to vector<16x128xf32>
    %106 = arith.maximumf %104, %105 : vector<16x128xf32>
    %107 = arith.truncf %106 : vector<16x128xf32> to vector<16x128xbf16>
    %c2_48 = arith.constant 2 : index
    %c0_49 = arith.constant 0 : index
    %c0_50 = arith.constant 0 : index
    %108 = vector.load %arg2[%c2_48, %c0_49, %c0_50] : memref<9x128x128xbf16, #tpu.memory_space<vmem>>, vector<1x128x128xbf16>
    %109 = vector.shape_cast %108 : vector<1x128x128xbf16> to vector<128x128xbf16>
    %cst_51 = arith.constant dense<0.000000e+00> : vector<16x128xf32>
    %110 = tpu.matmul %107, %109, %cst_51 {dimension_numbers = #tpu.dot_dimension_numbers<[1], [0], [0], [1], [0, 0, 1, 1], [], []>} : vector<16x128xbf16>, vector<128x128xbf16>, vector<16x128xf32> -> vector<16x128xf32>
    %c3 = arith.constant 3 : index
    %c0_52 = arith.constant 0 : index
    %c0_53 = arith.constant 0 : index
    %111 = vector.load %arg3[%c3, %c0_52, %c0_53] : memref<10x1x128xf32, #tpu.memory_space<vmem>>, vector<1x1x128xf32>
    %112 = vector.shape_cast %111 : vector<1x1x128xf32> to vector<1x128xf32>
    %c3_54 = arith.constant 3 : index
    %c0_55 = arith.constant 0 : index
    %c0_56 = arith.constant 0 : index
    %113 = vector.load %arg4[%c3_54, %c0_55, %c0_56] : memref<10x1x128xf32, #tpu.memory_space<vmem>>, vector<1x1x128xf32>
    %114 = vector.shape_cast %113 : vector<1x1x128xf32> to vector<1x128xf32>
    %cst_57 = arith.constant dense<0.000000e+00> : vector<128xf32>
    %115 = vector.multi_reduction <add>, %110, %cst_57 [0] : vector<16x128xf32> to vector<128xf32>
    %116 = vector.shape_cast %115 : vector<128xf32> to vector<1x128xf32>
    %117 = arith.mulf %110, %110 : vector<16x128xf32>
    %cst_58 = arith.constant dense<0.000000e+00> : vector<128xf32>
    %118 = vector.multi_reduction <add>, %117, %cst_58 [0] : vector<16x128xf32> to vector<128xf32>
    %119 = vector.shape_cast %118 : vector<128xf32> to vector<1x128xf32>
    %cst_59 = arith.constant 6.250000e-02 : f32
    %120 = vector.broadcast %cst_59 : f32 to vector<1x128xf32>
    %121 = arith.mulf %116, %120 : vector<1x128xf32>
    %cst_60 = arith.constant 6.250000e-02 : f32
    %122 = vector.broadcast %cst_60 : f32 to vector<1x128xf32>
    %123 = arith.mulf %119, %122 : vector<1x128xf32>
    %124 = arith.mulf %121, %121 : vector<1x128xf32>
    %125 = arith.subf %123, %124 : vector<1x128xf32>
    %cst_61 = arith.constant 9.99999974E-6 : f32
    %126 = vector.broadcast %cst_61 : f32 to vector<1x128xf32>
    %127 = arith.addf %125, %126 : vector<1x128xf32>
    %128 = math.rsqrt %127 : vector<1x128xf32>
    %129 = arith.mulf %112, %128 : vector<1x128xf32>
    %130 = arith.mulf %121, %129 : vector<1x128xf32>
    %131 = arith.subf %114, %130 : vector<1x128xf32>
    %132 = vector.broadcast %129 : vector<1x128xf32> to vector<16x128xf32>
    %133 = arith.mulf %110, %132 : vector<16x128xf32>
    %134 = vector.broadcast %131 : vector<1x128xf32> to vector<16x128xf32>
    %135 = arith.addf %133, %134 : vector<16x128xf32>
    %cst_62 = arith.constant 0.000000e+00 : f32
    %136 = vector.broadcast %cst_62 : f32 to vector<16x128xf32>
    %137 = arith.maximumf %135, %136 : vector<16x128xf32>
    %138 = arith.truncf %137 : vector<16x128xf32> to vector<16x128xbf16>
    %c3_63 = arith.constant 3 : index
    %c0_64 = arith.constant 0 : index
    %c0_65 = arith.constant 0 : index
    %139 = vector.load %arg2[%c3_63, %c0_64, %c0_65] : memref<9x128x128xbf16, #tpu.memory_space<vmem>>, vector<1x128x128xbf16>
    %140 = vector.shape_cast %139 : vector<1x128x128xbf16> to vector<128x128xbf16>
    %cst_66 = arith.constant dense<0.000000e+00> : vector<16x128xf32>
    %141 = tpu.matmul %138, %140, %cst_66 {dimension_numbers = #tpu.dot_dimension_numbers<[1], [0], [0], [1], [0, 0, 1, 1], [], []>} : vector<16x128xbf16>, vector<128x128xbf16>, vector<16x128xf32> -> vector<16x128xf32>
    %c4 = arith.constant 4 : index
    %c0_67 = arith.constant 0 : index
    %c0_68 = arith.constant 0 : index
    %142 = vector.load %arg3[%c4, %c0_67, %c0_68] : memref<10x1x128xf32, #tpu.memory_space<vmem>>, vector<1x1x128xf32>
    %143 = vector.shape_cast %142 : vector<1x1x128xf32> to vector<1x128xf32>
    %c4_69 = arith.constant 4 : index
    %c0_70 = arith.constant 0 : index
    %c0_71 = arith.constant 0 : index
    %144 = vector.load %arg4[%c4_69, %c0_70, %c0_71] : memref<10x1x128xf32, #tpu.memory_space<vmem>>, vector<1x1x128xf32>
    %145 = vector.shape_cast %144 : vector<1x1x128xf32> to vector<1x128xf32>
    %cst_72 = arith.constant dense<0.000000e+00> : vector<128xf32>
    %146 = vector.multi_reduction <add>, %141, %cst_72 [0] : vector<16x128xf32> to vector<128xf32>
    %147 = vector.shape_cast %146 : vector<128xf32> to vector<1x128xf32>
    %148 = arith.mulf %141, %141 : vector<16x128xf32>
    %cst_73 = arith.constant dense<0.000000e+00> : vector<128xf32>
    %149 = vector.multi_reduction <add>, %148, %cst_73 [0] : vector<16x128xf32> to vector<128xf32>
    %150 = vector.shape_cast %149 : vector<128xf32> to vector<1x128xf32>
    %cst_74 = arith.constant 6.250000e-02 : f32
    %151 = vector.broadcast %cst_74 : f32 to vector<1x128xf32>
    %152 = arith.mulf %147, %151 : vector<1x128xf32>
    %cst_75 = arith.constant 6.250000e-02 : f32
    %153 = vector.broadcast %cst_75 : f32 to vector<1x128xf32>
    %154 = arith.mulf %150, %153 : vector<1x128xf32>
    %155 = arith.mulf %152, %152 : vector<1x128xf32>
    %156 = arith.subf %154, %155 : vector<1x128xf32>
    %cst_76 = arith.constant 9.99999974E-6 : f32
    %157 = vector.broadcast %cst_76 : f32 to vector<1x128xf32>
    %158 = arith.addf %156, %157 : vector<1x128xf32>
    %159 = math.rsqrt %158 : vector<1x128xf32>
    %160 = arith.mulf %143, %159 : vector<1x128xf32>
    %161 = arith.mulf %152, %160 : vector<1x128xf32>
    %162 = arith.subf %145, %161 : vector<1x128xf32>
    %163 = vector.broadcast %160 : vector<1x128xf32> to vector<16x128xf32>
    %164 = arith.mulf %141, %163 : vector<16x128xf32>
    %165 = vector.broadcast %162 : vector<1x128xf32> to vector<16x128xf32>
    %166 = arith.addf %164, %165 : vector<16x128xf32>
    %cst_77 = arith.constant 0.000000e+00 : f32
    %167 = vector.broadcast %cst_77 : f32 to vector<16x128xf32>
    %168 = arith.maximumf %166, %167 : vector<16x128xf32>
    %169 = arith.truncf %168 : vector<16x128xf32> to vector<16x128xbf16>
    %c4_78 = arith.constant 4 : index
    %c0_79 = arith.constant 0 : index
    %c0_80 = arith.constant 0 : index
    %170 = vector.load %arg2[%c4_78, %c0_79, %c0_80] : memref<9x128x128xbf16, #tpu.memory_space<vmem>>, vector<1x128x128xbf16>
    %171 = vector.shape_cast %170 : vector<1x128x128xbf16> to vector<128x128xbf16>
    %cst_81 = arith.constant dense<0.000000e+00> : vector<16x128xf32>
    %172 = tpu.matmul %169, %171, %cst_81 {dimension_numbers = #tpu.dot_dimension_numbers<[1], [0], [0], [1], [0, 0, 1, 1], [], []>} : vector<16x128xbf16>, vector<128x128xbf16>, vector<16x128xf32> -> vector<16x128xf32>
    %c5 = arith.constant 5 : index
    %c0_82 = arith.constant 0 : index
    %c0_83 = arith.constant 0 : index
    %173 = vector.load %arg3[%c5, %c0_82, %c0_83] : memref<10x1x128xf32, #tpu.memory_space<vmem>>, vector<1x1x128xf32>
    %174 = vector.shape_cast %173 : vector<1x1x128xf32> to vector<1x128xf32>
    %c5_84 = arith.constant 5 : index
    %c0_85 = arith.constant 0 : index
    %c0_86 = arith.constant 0 : index
    %175 = vector.load %arg4[%c5_84, %c0_85, %c0_86] : memref<10x1x128xf32, #tpu.memory_space<vmem>>, vector<1x1x128xf32>
    %176 = vector.shape_cast %175 : vector<1x1x128xf32> to vector<1x128xf32>
    %cst_87 = arith.constant dense<0.000000e+00> : vector<128xf32>
    %177 = vector.multi_reduction <add>, %172, %cst_87 [0] : vector<16x128xf32> to vector<128xf32>
    %178 = vector.shape_cast %177 : vector<128xf32> to vector<1x128xf32>
    %179 = arith.mulf %172, %172 : vector<16x128xf32>
    %cst_88 = arith.constant dense<0.000000e+00> : vector<128xf32>
    %180 = vector.multi_reduction <add>, %179, %cst_88 [0] : vector<16x128xf32> to vector<128xf32>
    %181 = vector.shape_cast %180 : vector<128xf32> to vector<1x128xf32>
    %cst_89 = arith.constant 6.250000e-02 : f32
    %182 = vector.broadcast %cst_89 : f32 to vector<1x128xf32>
    %183 = arith.mulf %178, %182 : vector<1x128xf32>
    %cst_90 = arith.constant 6.250000e-02 : f32
    %184 = vector.broadcast %cst_90 : f32 to vector<1x128xf32>
    %185 = arith.mulf %181, %184 : vector<1x128xf32>
    %186 = arith.mulf %183, %183 : vector<1x128xf32>
    %187 = arith.subf %185, %186 : vector<1x128xf32>
    %cst_91 = arith.constant 9.99999974E-6 : f32
    %188 = vector.broadcast %cst_91 : f32 to vector<1x128xf32>
    %189 = arith.addf %187, %188 : vector<1x128xf32>
    %190 = math.rsqrt %189 : vector<1x128xf32>
    %191 = arith.mulf %174, %190 : vector<1x128xf32>
    %192 = arith.mulf %183, %191 : vector<1x128xf32>
    %193 = arith.subf %176, %192 : vector<1x128xf32>
    %194 = vector.broadcast %191 : vector<1x128xf32> to vector<16x128xf32>
    %195 = arith.mulf %172, %194 : vector<16x128xf32>
    %196 = vector.broadcast %193 : vector<1x128xf32> to vector<16x128xf32>
    %197 = arith.addf %195, %196 : vector<16x128xf32>
    %cst_92 = arith.constant 0.000000e+00 : f32
    %198 = vector.broadcast %cst_92 : f32 to vector<16x128xf32>
    %199 = arith.maximumf %197, %198 : vector<16x128xf32>
    %200 = arith.truncf %199 : vector<16x128xf32> to vector<16x128xbf16>
    %c5_93 = arith.constant 5 : index
    %c0_94 = arith.constant 0 : index
    %c0_95 = arith.constant 0 : index
    %201 = vector.load %arg2[%c5_93, %c0_94, %c0_95] : memref<9x128x128xbf16, #tpu.memory_space<vmem>>, vector<1x128x128xbf16>
    %202 = vector.shape_cast %201 : vector<1x128x128xbf16> to vector<128x128xbf16>
    %cst_96 = arith.constant dense<0.000000e+00> : vector<16x128xf32>
    %203 = tpu.matmul %200, %202, %cst_96 {dimension_numbers = #tpu.dot_dimension_numbers<[1], [0], [0], [1], [0, 0, 1, 1], [], []>} : vector<16x128xbf16>, vector<128x128xbf16>, vector<16x128xf32> -> vector<16x128xf32>
    %c6 = arith.constant 6 : index
    %c0_97 = arith.constant 0 : index
    %c0_98 = arith.constant 0 : index
    %204 = vector.load %arg3[%c6, %c0_97, %c0_98] : memref<10x1x128xf32, #tpu.memory_space<vmem>>, vector<1x1x128xf32>
    %205 = vector.shape_cast %204 : vector<1x1x128xf32> to vector<1x128xf32>
    %c6_99 = arith.constant 6 : index
    %c0_100 = arith.constant 0 : index
    %c0_101 = arith.constant 0 : index
    %206 = vector.load %arg4[%c6_99, %c0_100, %c0_101] : memref<10x1x128xf32, #tpu.memory_space<vmem>>, vector<1x1x128xf32>
    %207 = vector.shape_cast %206 : vector<1x1x128xf32> to vector<1x128xf32>
    %cst_102 = arith.constant dense<0.000000e+00> : vector<128xf32>
    %208 = vector.multi_reduction <add>, %203, %cst_102 [0] : vector<16x128xf32> to vector<128xf32>
    %209 = vector.shape_cast %208 : vector<128xf32> to vector<1x128xf32>
    %210 = arith.mulf %203, %203 : vector<16x128xf32>
    %cst_103 = arith.constant dense<0.000000e+00> : vector<128xf32>
    %211 = vector.multi_reduction <add>, %210, %cst_103 [0] : vector<16x128xf32> to vector<128xf32>
    %212 = vector.shape_cast %211 : vector<128xf32> to vector<1x128xf32>
    %cst_104 = arith.constant 6.250000e-02 : f32
    %213 = vector.broadcast %cst_104 : f32 to vector<1x128xf32>
    %214 = arith.mulf %209, %213 : vector<1x128xf32>
    %cst_105 = arith.constant 6.250000e-02 : f32
    %215 = vector.broadcast %cst_105 : f32 to vector<1x128xf32>
    %216 = arith.mulf %212, %215 : vector<1x128xf32>
    %217 = arith.mulf %214, %214 : vector<1x128xf32>
    %218 = arith.subf %216, %217 : vector<1x128xf32>
    %cst_106 = arith.constant 9.99999974E-6 : f32
    %219 = vector.broadcast %cst_106 : f32 to vector<1x128xf32>
    %220 = arith.addf %218, %219 : vector<1x128xf32>
    %221 = math.rsqrt %220 : vector<1x128xf32>
    %222 = arith.mulf %205, %221 : vector<1x128xf32>
    %223 = arith.mulf %214, %222 : vector<1x128xf32>
    %224 = arith.subf %207, %223 : vector<1x128xf32>
    %225 = vector.broadcast %222 : vector<1x128xf32> to vector<16x128xf32>
    %226 = arith.mulf %203, %225 : vector<16x128xf32>
    %227 = vector.broadcast %224 : vector<1x128xf32> to vector<16x128xf32>
    %228 = arith.addf %226, %227 : vector<16x128xf32>
    %cst_107 = arith.constant 0.000000e+00 : f32
    %229 = vector.broadcast %cst_107 : f32 to vector<16x128xf32>
    %230 = arith.maximumf %228, %229 : vector<16x128xf32>
    %231 = arith.truncf %230 : vector<16x128xf32> to vector<16x128xbf16>
    %c6_108 = arith.constant 6 : index
    %c0_109 = arith.constant 0 : index
    %c0_110 = arith.constant 0 : index
    %232 = vector.load %arg2[%c6_108, %c0_109, %c0_110] : memref<9x128x128xbf16, #tpu.memory_space<vmem>>, vector<1x128x128xbf16>
    %233 = vector.shape_cast %232 : vector<1x128x128xbf16> to vector<128x128xbf16>
    %cst_111 = arith.constant dense<0.000000e+00> : vector<16x128xf32>
    %234 = tpu.matmul %231, %233, %cst_111 {dimension_numbers = #tpu.dot_dimension_numbers<[1], [0], [0], [1], [0, 0, 1, 1], [], []>} : vector<16x128xbf16>, vector<128x128xbf16>, vector<16x128xf32> -> vector<16x128xf32>
    %c7 = arith.constant 7 : index
    %c0_112 = arith.constant 0 : index
    %c0_113 = arith.constant 0 : index
    %235 = vector.load %arg3[%c7, %c0_112, %c0_113] : memref<10x1x128xf32, #tpu.memory_space<vmem>>, vector<1x1x128xf32>
    %236 = vector.shape_cast %235 : vector<1x1x128xf32> to vector<1x128xf32>
    %c7_114 = arith.constant 7 : index
    %c0_115 = arith.constant 0 : index
    %c0_116 = arith.constant 0 : index
    %237 = vector.load %arg4[%c7_114, %c0_115, %c0_116] : memref<10x1x128xf32, #tpu.memory_space<vmem>>, vector<1x1x128xf32>
    %238 = vector.shape_cast %237 : vector<1x1x128xf32> to vector<1x128xf32>
    %cst_117 = arith.constant dense<0.000000e+00> : vector<128xf32>
    %239 = vector.multi_reduction <add>, %234, %cst_117 [0] : vector<16x128xf32> to vector<128xf32>
    %240 = vector.shape_cast %239 : vector<128xf32> to vector<1x128xf32>
    %241 = arith.mulf %234, %234 : vector<16x128xf32>
    %cst_118 = arith.constant dense<0.000000e+00> : vector<128xf32>
    %242 = vector.multi_reduction <add>, %241, %cst_118 [0] : vector<16x128xf32> to vector<128xf32>
    %243 = vector.shape_cast %242 : vector<128xf32> to vector<1x128xf32>
    %cst_119 = arith.constant 6.250000e-02 : f32
    %244 = vector.broadcast %cst_119 : f32 to vector<1x128xf32>
    %245 = arith.mulf %240, %244 : vector<1x128xf32>
    %cst_120 = arith.constant 6.250000e-02 : f32
    %246 = vector.broadcast %cst_120 : f32 to vector<1x128xf32>
    %247 = arith.mulf %243, %246 : vector<1x128xf32>
    %248 = arith.mulf %245, %245 : vector<1x128xf32>
    %249 = arith.subf %247, %248 : vector<1x128xf32>
    %cst_121 = arith.constant 9.99999974E-6 : f32
    %250 = vector.broadcast %cst_121 : f32 to vector<1x128xf32>
    %251 = arith.addf %249, %250 : vector<1x128xf32>
    %252 = math.rsqrt %251 : vector<1x128xf32>
    %253 = arith.mulf %236, %252 : vector<1x128xf32>
    %254 = arith.mulf %245, %253 : vector<1x128xf32>
    %255 = arith.subf %238, %254 : vector<1x128xf32>
    %256 = vector.broadcast %253 : vector<1x128xf32> to vector<16x128xf32>
    %257 = arith.mulf %234, %256 : vector<16x128xf32>
    %258 = vector.broadcast %255 : vector<1x128xf32> to vector<16x128xf32>
    %259 = arith.addf %257, %258 : vector<16x128xf32>
    %cst_122 = arith.constant 0.000000e+00 : f32
    %260 = vector.broadcast %cst_122 : f32 to vector<16x128xf32>
    %261 = arith.maximumf %259, %260 : vector<16x128xf32>
    %262 = arith.truncf %261 : vector<16x128xf32> to vector<16x128xbf16>
    %c7_123 = arith.constant 7 : index
    %c0_124 = arith.constant 0 : index
    %c0_125 = arith.constant 0 : index
    %263 = vector.load %arg2[%c7_123, %c0_124, %c0_125] : memref<9x128x128xbf16, #tpu.memory_space<vmem>>, vector<1x128x128xbf16>
    %264 = vector.shape_cast %263 : vector<1x128x128xbf16> to vector<128x128xbf16>
    %cst_126 = arith.constant dense<0.000000e+00> : vector<16x128xf32>
    %265 = tpu.matmul %262, %264, %cst_126 {dimension_numbers = #tpu.dot_dimension_numbers<[1], [0], [0], [1], [0, 0, 1, 1], [], []>} : vector<16x128xbf16>, vector<128x128xbf16>, vector<16x128xf32> -> vector<16x128xf32>
    %c8 = arith.constant 8 : index
    %c0_127 = arith.constant 0 : index
    %c0_128 = arith.constant 0 : index
    %266 = vector.load %arg3[%c8, %c0_127, %c0_128] : memref<10x1x128xf32, #tpu.memory_space<vmem>>, vector<1x1x128xf32>
    %267 = vector.shape_cast %266 : vector<1x1x128xf32> to vector<1x128xf32>
    %c8_129 = arith.constant 8 : index
    %c0_130 = arith.constant 0 : index
    %c0_131 = arith.constant 0 : index
    %268 = vector.load %arg4[%c8_129, %c0_130, %c0_131] : memref<10x1x128xf32, #tpu.memory_space<vmem>>, vector<1x1x128xf32>
    %269 = vector.shape_cast %268 : vector<1x1x128xf32> to vector<1x128xf32>
    %cst_132 = arith.constant dense<0.000000e+00> : vector<128xf32>
    %270 = vector.multi_reduction <add>, %265, %cst_132 [0] : vector<16x128xf32> to vector<128xf32>
    %271 = vector.shape_cast %270 : vector<128xf32> to vector<1x128xf32>
    %272 = arith.mulf %265, %265 : vector<16x128xf32>
    %cst_133 = arith.constant dense<0.000000e+00> : vector<128xf32>
    %273 = vector.multi_reduction <add>, %272, %cst_133 [0] : vector<16x128xf32> to vector<128xf32>
    %274 = vector.shape_cast %273 : vector<128xf32> to vector<1x128xf32>
    %cst_134 = arith.constant 6.250000e-02 : f32
    %275 = vector.broadcast %cst_134 : f32 to vector<1x128xf32>
    %276 = arith.mulf %271, %275 : vector<1x128xf32>
    %cst_135 = arith.constant 6.250000e-02 : f32
    %277 = vector.broadcast %cst_135 : f32 to vector<1x128xf32>
    %278 = arith.mulf %274, %277 : vector<1x128xf32>
    %279 = arith.mulf %276, %276 : vector<1x128xf32>
    %280 = arith.subf %278, %279 : vector<1x128xf32>
    %cst_136 = arith.constant 9.99999974E-6 : f32
    %281 = vector.broadcast %cst_136 : f32 to vector<1x128xf32>
    %282 = arith.addf %280, %281 : vector<1x128xf32>
    %283 = math.rsqrt %282 : vector<1x128xf32>
    %284 = arith.mulf %267, %283 : vector<1x128xf32>
    %285 = arith.mulf %276, %284 : vector<1x128xf32>
    %286 = arith.subf %269, %285 : vector<1x128xf32>
    %287 = vector.broadcast %284 : vector<1x128xf32> to vector<16x128xf32>
    %288 = arith.mulf %265, %287 : vector<16x128xf32>
    %289 = vector.broadcast %286 : vector<1x128xf32> to vector<16x128xf32>
    %290 = arith.addf %288, %289 : vector<16x128xf32>
    %cst_137 = arith.constant 0.000000e+00 : f32
    %291 = vector.broadcast %cst_137 : f32 to vector<16x128xf32>
    %292 = arith.maximumf %290, %291 : vector<16x128xf32>
    %293 = arith.truncf %292 : vector<16x128xf32> to vector<16x128xbf16>
    %c8_138 = arith.constant 8 : index
    %c0_139 = arith.constant 0 : index
    %c0_140 = arith.constant 0 : index
    %294 = vector.load %arg2[%c8_138, %c0_139, %c0_140] : memref<9x128x128xbf16, #tpu.memory_space<vmem>>, vector<1x128x128xbf16>
    %295 = vector.shape_cast %294 : vector<1x128x128xbf16> to vector<128x128xbf16>
    %cst_141 = arith.constant dense<0.000000e+00> : vector<16x128xf32>
    %296 = tpu.matmul %293, %295, %cst_141 {dimension_numbers = #tpu.dot_dimension_numbers<[1], [0], [0], [1], [0, 0, 1, 1], [], []>} : vector<16x128xbf16>, vector<128x128xbf16>, vector<16x128xf32> -> vector<16x128xf32>
    %c9 = arith.constant 9 : index
    %c0_142 = arith.constant 0 : index
    %c0_143 = arith.constant 0 : index
    %297 = vector.load %arg3[%c9, %c0_142, %c0_143] : memref<10x1x128xf32, #tpu.memory_space<vmem>>, vector<1x1x128xf32>
    %298 = vector.shape_cast %297 : vector<1x1x128xf32> to vector<1x128xf32>
    %c9_144 = arith.constant 9 : index
    %c0_145 = arith.constant 0 : index
    %c0_146 = arith.constant 0 : index
    %299 = vector.load %arg4[%c9_144, %c0_145, %c0_146] : memref<10x1x128xf32, #tpu.memory_space<vmem>>, vector<1x1x128xf32>
    %300 = vector.shape_cast %299 : vector<1x1x128xf32> to vector<1x128xf32>
    %cst_147 = arith.constant dense<0.000000e+00> : vector<128xf32>
    %301 = vector.multi_reduction <add>, %296, %cst_147 [0] : vector<16x128xf32> to vector<128xf32>
    %302 = vector.shape_cast %301 : vector<128xf32> to vector<1x128xf32>
    %303 = arith.mulf %296, %296 : vector<16x128xf32>
    %cst_148 = arith.constant dense<0.000000e+00> : vector<128xf32>
    %304 = vector.multi_reduction <add>, %303, %cst_148 [0] : vector<16x128xf32> to vector<128xf32>
    %305 = vector.shape_cast %304 : vector<128xf32> to vector<1x128xf32>
    %cst_149 = arith.constant 6.250000e-02 : f32
    %306 = vector.broadcast %cst_149 : f32 to vector<1x128xf32>
    %307 = arith.mulf %302, %306 : vector<1x128xf32>
    %cst_150 = arith.constant 6.250000e-02 : f32
    %308 = vector.broadcast %cst_150 : f32 to vector<1x128xf32>
    %309 = arith.mulf %305, %308 : vector<1x128xf32>
    %310 = arith.mulf %307, %307 : vector<1x128xf32>
    %311 = arith.subf %309, %310 : vector<1x128xf32>
    %cst_151 = arith.constant 9.99999974E-6 : f32
    %312 = vector.broadcast %cst_151 : f32 to vector<1x128xf32>
    %313 = arith.addf %311, %312 : vector<1x128xf32>
    %314 = math.rsqrt %313 : vector<1x128xf32>
    %315 = arith.mulf %298, %314 : vector<1x128xf32>
    %316 = arith.mulf %307, %315 : vector<1x128xf32>
    %317 = arith.subf %300, %316 : vector<1x128xf32>
    %318 = vector.broadcast %315 : vector<1x128xf32> to vector<16x128xf32>
    %319 = arith.mulf %296, %318 : vector<16x128xf32>
    %320 = vector.broadcast %317 : vector<1x128xf32> to vector<16x128xf32>
    %321 = arith.addf %319, %320 : vector<16x128xf32>
    %cst_152 = arith.constant 0.000000e+00 : f32
    %322 = vector.broadcast %cst_152 : f32 to vector<16x128xf32>
    %323 = arith.maximumf %321, %322 : vector<16x128xf32>
    %324 = arith.truncf %323 : vector<16x128xf32> to vector<16x128xbf16>
    %c0_153 = arith.constant 0 : index
    %c0_154 = arith.constant 0 : index
    %325 = vector.load %arg5[%c0_153, %c0_154] : memref<16x128xbf16, #tpu.memory_space<vmem>>, vector<16x128xbf16>
    %326 = tpu.transpose %324, [1, 0] : vector<16x128xbf16> -> vector<128x16xbf16>
    %cst_155 = arith.constant dense<0.000000e+00> : vector<16x16xf32>
    %327 = tpu.matmul %325, %326, %cst_155 {dimension_numbers = #tpu.dot_dimension_numbers<[1], [0], [0], [1], [0, 0, 1, 1], [], []>} : vector<16x128xbf16>, vector<128x16xbf16>, vector<16x16xf32> -> vector<16x16xf32>
    %c0_156 = arith.constant 0 : index
    %c0_157 = arith.constant 0 : index
    %328 = vector.load %arg6[%c0_156, %c0_157] : memref<16x1xf32, #tpu.memory_space<vmem>>, vector<16x1xf32>
    %329 = vector.broadcast %328 : vector<16x1xf32> to vector<16x16xf32>
    %330 = arith.addf %327, %329 : vector<16x16xf32>
    %c0_158 = arith.constant 0 : index
    %c0_159 = arith.constant 0 : index
    %331 = vector.load %arg7[%c0_158, %c0_159] : memref<16x16xf32, #tpu.memory_space<vmem>>, vector<16x16xf32>
    tpu.vector_store %arg7[%c0_158, %c0_159], %330 {strides = array<i32>} : memref<16x16xf32, #tpu.memory_space<vmem>>, vector<16x16xf32>,
    return
  }
}

</mosaic_0001>

<llo_original>
// kernel: _forward_jit.1
$region0: #{_forward_jit.1}
  #allocation0 [shape = 'u32[]', space=smem, size = 0x4, offset = 0x4, fixed_abs, tag = 'smem constant byte address 0x4 - core index']
  #allocation1 [shape = 'u32[144,128]{1,0:T(1,128)}', space=vmem, size = 0x12000, scoped, tag = 'internal scratch']
  %s0 = inlined_call_operand.vmem [shape: f32[16,3], index: 0, kind: input, shape index: {}]
  %s1 = inlined_call_operand.vmem [shape: f32[3,128], index: 1, kind: input, shape index: {}]
  %s2 = inlined_call_operand.hbm [shape: bf16[9,128,128], index: 2, kind: input, shape index: {}]
  %s3 = inlined_call_operand.vmem [shape: f32[10,1,128], index: 3, kind: input, shape index: {}]
  %s4 = inlined_call_operand.vmem [shape: f32[10,1,128], index: 4, kind: input, shape index: {}]
  %s5 = inlined_call_operand.vmem [shape: bf16[16,128], index: 5, kind: input, shape index: {}]
  %s6 = inlined_call_operand.vmem [shape: f32[16,1], index: 6, kind: input, shape index: {}]
  %s7 = inlined_call_operand.vmem [shape: f32[16,16], index: 7, kind: output, shape index: {}]
  %s8 = sld [smem:[#allocation0]]
  $region42: #{_forward_jit.1} parent=0
    _
  %s10 = ssub.s32 1, %s8
  %s11 = scalar_select 0, %s10, %s8
  $region1: #{_forward_jit.1} parent=0
    #allocation2 [shape = 'u8[294912]{0}', space=vmem, size = 0x48000, scoped, tag = 'input window, operand 2, single buffered']
    #allocation3 [shape = 's32[1]{0}', space=sflag, size = 0x4, scoped, tag = 'scoped memory for _forward_jit.1']
    %12 = vsyncpa [#allocation3], 0
    // Predicated region
    $region2: #{_forward_jit.1} parent=1 // pred_check
      _
    $region3: #{_forward_jit.1} parent=1 // pred_check_branch
      %14 = sbr.rel (0) target = $region5
    $region4: #{_forward_jit.1} parent=1 // pred_region
      _
    $region5: #{_forward_jit.1} parent=1 // pred_fallthru
      _
    // Predicated region
    $region6: #{_forward_jit.1} parent=1 // pred_check
      _
    $region7: #{_forward_jit.1} parent=1 // pred_check_branch
      %16 = sbr.rel (0) target = $region9
    $region8: #{_forward_jit.1} parent=1 // pred_region
      _
    $region9: #{_forward_jit.1} parent=1 // pred_fallthru
      _
    // Predicated region
    $region10: #{_forward_jit.1} parent=1 // pred_check
      _
    $region11: #{_forward_jit.1} parent=1 // pred_check_branch
      %18 = sbr.rel (0) target = $region13
    $region12: #{_forward_jit.1} parent=1 // pred_region
      %s20 = ssub.s32 9216, 9216
      %21 = vsyncadd [#allocation3], %s20
      %s22 = sshll.u32 [#allocation2], 4
      %s23 = int_to_ptr.vmem [resolvable:$true] %s22
      %28 = dma.hbm_to_vmem [thread:$0]  %s2, 9216, %s23, [#allocation3], 64, 64, 4
    $region13: #{_forward_jit.1} parent=1 // pred_fallthru
      _
    // Predicated region
    $region14: #{_forward_jit.1} parent=1 // pred_check
      _
    $region15: #{_forward_jit.1} parent=1 // pred_check_branch
      %30 = sbr.rel (0) target = $region17
    $region16: #{_forward_jit.1} parent=1 // pred_region
      _
    $region17: #{_forward_jit.1} parent=1 // pred_fallthru
      _
    // Predicated region
    $region18: #{_forward_jit.1} parent=1 // pred_check
      _
    $region19: #{_forward_jit.1} parent=1 // pred_check_branch
      %32 = sbr.rel (0) target = $region21
    $region20: #{_forward_jit.1} parent=1 // pred_region
      _
    $region21: #{_forward_jit.1} parent=1 // pred_fallthru
      _
    // Predicated region
    $region22: #{_forward_jit.1} parent=1 // pred_check
      _
    $region23: #{_forward_jit.1} parent=1 // pred_check_branch
      %34 = sbr.rel (0) target = $region25
    $region24: #{_forward_jit.1} parent=1 // pred_region
      _
    $region25: #{_forward_jit.1} parent=1 // pred_fallthru
      _
    // Predicated region
    $region26: #{_forward_jit.1} parent=1 // pred_check
      _
    $region27: #{_forward_jit.1} parent=1 // pred_check_branch
      %36 = sbr.rel (0) target = $region29
    $region28: #{_forward_jit.1} parent=1 // pred_region
      _
    $region29: #{_forward_jit.1} parent=1 // pred_fallthru
      _
    // Predicated region
    $region30: #{_forward_jit.1} parent=1 // pred_check
      _
    $region31: #{_forward_jit.1} parent=1 // pred_check_branch
      %38 = sbr.rel (0) target = $region33
    $region32: #{_forward_jit.1} parent=1 // pred_region
      %39 = dma.done [#allocation3], 9216
    $region33: #{_forward_jit.1} parent=1 // pred_fallthru
      _
    %v41 = vld [vmem:[%s1] sm:$0x7]
    %v42 = vld [vmem:[%s0] sm:$0xff]
    %v43 = vld [vmem:[%s0 + $0x8] sm:$0xff]
    %45 = vset.pattern.permute.xlu0 0
    %46 = vperm.xlu0 %45, %v42
    %v47 = vpop.permute.xlu0 %46
    %50 = vset.pattern.permute.xlu0 0
    %51 = vperm.xlu0 %50, %v43
    %v52 = vpop.permute.xlu0 %51
    %v54 = vlaneseq
    %v55 = vshrl.u32 %v54, 7
    %v56 = vsub.s32 0, %v55
    %v57 = vrot.slane %v41, %v56
    %v58 = vmul.f32 %v47, %v57
    %v59 = vmul.f32 %v52, %v57
    %60 = vset.pattern.permute.xlu0 1
    %61 = vperm.xlu0 %60, %v42
    %v62 = vpop.permute.xlu0 %61
    %64 = vset.pattern.permute.xlu0 1
    %65 = vperm.xlu0 %64, %v43
    %v66 = vpop.permute.xlu0 %65
    %v68 = vlaneseq
    %v69 = vshrl.u32 %v68, 7
    %v70 = vsub.s32 1, %v69
    %v71 = vrot.slane %v41, %v70
    %v72 = vmul.f32 %v62, %v71
    %v73 = vmul.f32 %v66, %v71
    %v74 = vadd.f32 %v58, %v72
    %v75 = vadd.f32 %v59, %v73
    %76 = vset.pattern.permute.xlu0 2
    %77 = vperm.xlu0 %76, %v42
    %v78 = vpop.permute.xlu0 %77
    %80 = vset.pattern.permute.xlu0 2
    %81 = vperm.xlu0 %80, %v43
    %v82 = vpop.permute.xlu0 %81
    %v84 = vlaneseq
    %v85 = vshrl.u32 %v84, 7
    %v86 = vsub.s32 2, %v85
    %v87 = vrot.slane %v41, %v86
    %v88 = vmul.f32 %v78, %v87
    %v89 = vmul.f32 %v82, %v87
    %v90 = vadd.f32 %v74, %v88
    %v91 = vadd.f32 %v75, %v89
    %v92 = vld [vmem:[%s3] sm:$0x1]
    %v93 = vld [vmem:[%s4] sm:$0x1]
    %v94 = vadd.f32 %v90, %v91
    %v95 = vrot.slane %v94, 4
    %v96 = vadd.f32 %v94, %v95
    %v97 = vrot.slane %v96, 2
    %v98 = vadd.f32 %v96, %v97
    %v99 = vrot.slane %v98, 1
    %v100 = vadd.f32 %v98, %v99
    %v101 = vmul.f32 %v90, %v90
    %v102 = vmul.f32 %v91, %v91
    %v103 = vadd.f32 %v101, %v102
    %v104 = vrot.slane %v103, 4
    %v105 = vadd.f32 %v103, %v104
    %v106 = vrot.slane %v105, 2
    %v107 = vadd.f32 %v105, %v106
    %v108 = vrot.slane %v107, 1
    %v109 = vadd.f32 %v107, %v108
    %v110 = vmul.f32 %v100, 0.0625
    %v111 = vmul.f32 %v109, 0.0625
    %v112 = vmul.f32 %v110, %v110
    %v113 = vsub.f32 %v111, %v112
    %v114 = vadd.f32 %v113, 1e-05
    %v115 = vrsqrt.pop %v114
    %v116 = vmul.f32 %v92, %v115
    %v117 = vmul.f32 %v110, %v116
    %v118 = vsub.f32 %v93, %v117
    %v120 = vlaneseq
    %v121 = vshrl.u32 %v120, 7
    %v122 = vsub.s32 0, %v121
    %v123 = vrot.slane %v116, %v122
    %v125 = vmul.f32 %v90, %v123
    %v126 = vmul.f32 %v91, %v123
    %v128 = vlaneseq
    %v129 = vshrl.u32 %v128, 7
    %v130 = vsub.s32 0, %v129
    %v131 = vrot.slane %v118, %v130
    %v133 = vadd.f32 %v125, %v131
    %v134 = vadd.f32 %v126, %v131
    %v135 = vmax.f32 %v133, 0.0
    %v136 = vmax.f32 %v134, 0.0
    %v137 = vpack.c.bf16 %v136, %v135
    %v138 = vld [vmem:[#allocation2] sm:$0xf]
    %v139 = vld [vmem:[#allocation2 + $0x4] sm:$0xf]
    %v140 = vld [vmem:[#allocation2 + $0x8] sm:$0xf]
    %v141 = vld [vmem:[#allocation2 + $0xc] sm:$0xf]
    %v142 = vld [vmem:[#allocation2 + $0x10] sm:$0xf]
    %v143 = vld [vmem:[#allocation2 + $0x14] sm:$0xf]
    %v144 = vld [vmem:[#allocation2 + $0x18] sm:$0xf]
    %v145 = vld [vmem:[#allocation2 + $0x1c] sm:$0xf]
    %v146 = vld [vmem:[#allocation2 + $0x20] sm:$0xf]
    %v147 = vld [vmem:[#allocation2 + $0x24] sm:$0xf]
    %v148 = vld [vmem:[#allocation2 + $0x28] sm:$0xf]
    %v149 = vld [vmem:[#allocation2 + $0x2c] sm:$0xf]
    %v150 = vld [vmem:[#allocation2 + $0x30] sm:$0xf]
    %v151 = vld [vmem:[#allocation2 + $0x34] sm:$0xf]
    %v152 = vld [vmem:[#allocation2 + $0x38] sm:$0xf]
    %v153 = vld [vmem:[#allocation2 + $0x3c] sm:$0xf]
    %v170 = vunpack.c.l.b16 %v138
    %v171 = vunpack.c.l.b16 %v139
    %v172 = vunpack.c.l.b16 %v140
    %v173 = vunpack.c.l.b16 %v141
    %v174 = vunpack.c.l.b16 %v142
    %v175 = vunpack.c.l.b16 %v143
    %v176 = vunpack.c.l.b16 %v144
    %v177 = vunpack.c.l.b16 %v145
    %v178 = vunpack.c.l.b16 %v146
    %v179 = vunpack.c.l.b16 %v147
    %v180 = vunpack.c.l.b16 %v148
    %v181 = vunpack.c.l.b16 %v149
    %v182 = vunpack.c.l.b16 %v150
    %v183 = vunpack.c.l.b16 %v151
    %v184 = vunpack.c.l.b16 %v152
    %v185 = vunpack.c.l.b16 %v153
    %v186 = vpack.c.b16 %v171, %v170
    %v187 = vpack.c.b16 %v173, %v172
    %v188 = vpack.c.b16 %v175, %v174
    %v189 = vpack.c.b16 %v177, %v176
    %v190 = vpack.c.b16 %v179, %v178
    %v191 = vpack.c.b16 %v181, %v180
    %v192 = vpack.c.b16 %v183, %v182
    %v193 = vpack.c.b16 %v185, %v184
    %202 = vmatprep.subr.bf16.mxu0 0
    %203 = vmatpush1.bf16.msra.mxu0 %v186
    %204 = vmatprep.subr.bf16.mxu0 0
    %205 = vmatpush1.bf16.msra.mxu0 %v187
    %206 = vmatprep.subr.bf16.mxu0 0
    %207 = vmatpush1.bf16.msra.mxu0 %v188
    %208 = vmatprep.subr.bf16.mxu0 0
    %209 = vmatpush1.bf16.msra.mxu0 %v189
    %210 = vmatprep.subr.bf16.mxu0 0
    %211 = vmatpush1.bf16.msra.mxu0 %v190
    %212 = vmatprep.subr.bf16.mxu0 0
    %213 = vmatpush1.bf16.msra.mxu0 %v191
    %214 = vmatprep.subr.bf16.mxu0 0
    %215 = vmatpush1.bf16.msra.mxu0 %v192
    %216 = vmatprep.subr.bf16.mxu0 0
    %217 = vmatpush1.bf16.msra.mxu0 %v193
    %218 = vmatprep.subr.bf16.mxu0 0
    %219 = vmatpush1.bf16.msra.mxu0 0
    %220 = vmatprep.subr.bf16.mxu0 0
    %221 = vmatpush1.bf16.msra.mxu0 0
    %222 = vmatprep.subr.bf16.mxu0 0
    %223 = vmatpush1.bf16.msra.mxu0 0
    %224 = vmatprep.subr.bf16.mxu0 0
    %225 = vmatpush1.bf16.msra.mxu0 0
    %226 = vmatprep.subr.bf16.mxu0 0
    %227 = vmatpush1.bf16.msra.mxu0 0
    %228 = vmatprep.subr.bf16.mxu0 0
    %229 = vmatpush1.bf16.msra.mxu0 0
    %230 = vmatprep.subr.bf16.mxu0 0
    %231 = vmatpush1.bf16.msra.mxu0 0
    %232 = vmatprep.subr.bf16.mxu0 0
    %233 = vmatpush1.bf16.msra.mxu0 0
    %234 = vmatprep.mubr.bf16.mxu0 0
    %235 = vmatmul.mubr.bf16.gmra.mrb[0].mxu0 %v137
    %v236 = vpop.f32.mrb[0].mxu0
    %v237 = vadd.f32 0.0, %v236
    %v238 = vpop.f32.mrb[0].mxu0
    %v239 = vpop.f32.mrb[0].mxu0
    %v240 = vadd.f32 0.0, %v239
    %v241 = vpop.f32.mrb[0].mxu0
    %242 = vdwg.mxu0
    %s243 = scalar_lea.vmem %s3, 1
    %v244 = vld [vmem:[%s243] sm:$0x1]
    %s245 = scalar_lea.vmem %s4, 1
    %v246 = vld [vmem:[%s245] sm:$0x1]
    %v247 = vadd.f32 %v237, %v240
    %v248 = vrot.slane %v247, 4
    %v249 = vadd.f32 %v247, %v248
    %v250 = vrot.slane %v249, 2
    %v251 = vadd.f32 %v249, %v250
    %v252 = vrot.slane %v251, 1
    %v253 = vadd.f32 %v251, %v252
    %v254 = vmul.f32 %v237, %v237
    %v255 = vmul.f32 %v240, %v240
    %v256 = vadd.f32 %v254, %v255
    %v257 = vrot.slane %v256, 4
    %v258 = vadd.f32 %v256, %v257
    %v259 = vrot.slane %v258, 2
    %v260 = vadd.f32 %v258, %v259
    %v261 = vrot.slane %v260, 1
    %v262 = vadd.f32 %v260, %v261
    %v263 = vmul.f32 %v253, 0.0625
    %v264 = vmul.f32 %v262, 0.0625
    %v265 = vmul.f32 %v263, %v263
    %v266 = vsub.f32 %v264, %v265
    %v267 = vadd.f32 %v266, 1e-05
    %v268 = vrsqrt.pop %v267
    %v269 = vmul.f32 %v244, %v268
    %v270 = vmul.f32 %v263, %v269
    %v271 = vsub.f32 %v246, %v270
    %v273 = vlaneseq
    %v274 = vshrl.u32 %v273, 7
    %v275 = vsub.s32 0, %v274
    %v276 = vrot.slane %v269, %v275
    %v278 = vmul.f32 %v237, %v276
    %v279 = vmul.f32 %v240, %v276
    %v281 = vlaneseq
    %v282 = vshrl.u32 %v281, 7
    %v283 = vsub.s32 0, %v282
    %v284 = vrot.slane %v271, %v283
    %v286 = vadd.f32 %v278, %v284
    %v287 = vadd.f32 %v279, %v284
    %v288 = vmax.f32 %v286, 0.0
    %v289 = vmax.f32 %v287, 0.0
    %v290 = vpack.c.bf16 %v289, %v288
    %s291 = scalar_lea.vmem [#allocation2], 64
    %v292 = vld [vmem:[%s291] sm:$0xf]
    %v293 = vld [vmem:[%s291 + $0x4] sm:$0xf]
    %v294 = vld [vmem:[%s291 + $0x8] sm:$0xf]
    %v295 = vld [vmem:[%s291 + $0xc] sm:$0xf]
    %v296 = vld [vmem:[%s291 + $0x10] sm:$0xf]
    %v297 = vld [vmem:[%s291 + $0x14] sm:$0xf]
    %v298 = vld [vmem:[%s291 + $0x18] sm:$0xf]
    %v299 = vld [vmem:[%s291 + $0x1c] sm:$0xf]
    %v300 = vld [vmem:[%s291 + $0x20] sm:$0xf]
    %v301 = vld [vmem:[%s291 + $0x24] sm:$0xf]
    %v302 = vld [vmem:[%s291 + $0x28] sm:$0xf]
    %v303 = vld [vmem:[%s291 + $0x2c] sm:$0xf]
    %v304 = vld [vmem:[%s291 + $0x30] sm:$0xf]
    %v305 = vld [vmem:[%s291 + $0x34] sm:$0xf]
    %v306 = vld [vmem:[%s291 + $0x38] sm:$0xf]
    %v307 = vld [vmem:[%s291 + $0x3c] sm:$0xf]
    %v324 = vunpack.c.l.b16 %v292
    %v325 = vunpack.c.l.b16 %v293
    %v326 = vunpack.c.l.b16 %v294
    %v327 = vunpack.c.l.b16 %v295
    %v328 = vunpack.c.l.b16 %v296
    %v329 = vunpack.c.l.b16 %v297
    %v330 = vunpack.c.l.b16 %v298
    %v331 = vunpack.c.l.b16 %v299
    %v332 = vunpack.c.l.b16 %v300
    %v333 = vunpack.c.l.b16 %v301
    %v334 = vunpack.c.l.b16 %v302
    %v335 = vunpack.c.l.b16 %v303
    %v336 = vunpack.c.l.b16 %v304
    %v337 = vunpack.c.l.b16 %v305
    %v338 = vunpack.c.l.b16 %v306
    %v339 = vunpack.c.l.b16 %v307
    %v340 = vpack.c.b16 %v325, %v324
    %v341 = vpack.c.b16 %v327, %v326
    %v342 = vpack.c.b16 %v329, %v328
    %v343 = vpack.c.b16 %v331, %v330
    %v344 = vpack.c.b16 %v333, %v332
    %v345 = vpack.c.b16 %v335, %v334
    %v346 = vpack.c.b16 %v337, %v336
    %v347 = vpack.c.b16 %v339, %v338
    %356 = vmatprep.subr.bf16.mxu0 0
    %357 = vmatpush1.bf16.msra.mxu0 %v340
    %358 = vmatprep.subr.bf16.mxu0 0
    %359 = vmatpush1.bf16.msra.mxu0 %v341
    %360 = vmatprep.subr.bf16.mxu0 0
    %361 = vmatpush1.bf16.msra.mxu0 %v342
    %362 = vmatprep.subr.bf16.mxu0 0
    %363 = vmatpush1.bf16.msra.mxu0 %v343
    %364 = vmatprep.subr.bf16.mxu0 0
    %365 = vmatpush1.bf16.msra.mxu0 %v344
    %366 = vmatprep.subr.bf16.mxu0 0
    %367 = vmatpush1.bf16.msra.mxu0 %v345
    %368 = vmatprep.subr.bf16.mxu0 0
    %369 = vmatpush1.bf16.msra.mxu0 %v346
    %370 = vmatprep.subr.bf16.mxu0 0
    %371 = vmatpush1.bf16.msra.mxu0 %v347
    %372 = vmatprep.subr.bf16.mxu0 0
    %373 = vmatpush1.bf16.msra.mxu0 0
    %374 = vmatprep.subr.bf16.mxu0 0
    %375 = vmatpush1.bf16.msra.mxu0 0
    %376 = vmatprep.subr.bf16.mxu0 0
    %377 = vmatpush1.bf16.msra.mxu0 0
    %378 = vmatprep.subr.bf16.mxu0 0
    %379 = vmatpush1.bf16.msra.mxu0 0
    %380 = vmatprep.subr.bf16.mxu0 0
    %381 = vmatpush1.bf16.msra.mxu0 0
    %382 = vmatprep.subr.bf16.mxu0 0
    %383 = vmatpush1.bf16.msra.mxu0 0
    %384 = vmatprep.subr.bf16.mxu0 0
    %385 = vmatpush1.bf16.msra.mxu0 0
    %386 = vmatprep.subr.bf16.mxu0 0
    %387 = vmatpush1.bf16.msra.mxu0 0
    %388 = vmatprep.mubr.bf16.mxu0 0
    %389 = vmatmul.mubr.bf16.gmra.mrb[0].mxu0 %v290
    %v390 = vpop.f32.mrb[0].mxu0
    %v391 = vadd.f32 0.0, %v390
    %v392 = vpop.f32.mrb[0].mxu0
    %v393 = vpop.f32.mrb[0].mxu0
    %v394 = vadd.f32 0.0, %v393
    %v395 = vpop.f32.mrb[0].mxu0
    %396 = vdwg.mxu0
    %s397 = scalar_lea.vmem %s3, 2
    %v398 = vld [vmem:[%s397] sm:$0x1]
    %s399 = scalar_lea.vmem %s4, 2
    %v400 = vld [vmem:[%s399] sm:$0x1]
    %v401 = vadd.f32 %v391, %v394
    %v402 = vrot.slane %v401, 4
    %v403 = vadd.f32 %v401, %v402
    %v404 = vrot.slane %v403, 2
    %v405 = vadd.f32 %v403, %v404
    %v406 = vrot.slane %v405, 1
    %v407 = vadd.f32 %v405, %v406
    %v408 = vmul.f32 %v391, %v391
    %v409 = vmul.f32 %v394, %v394
    %v410 = vadd.f32 %v408, %v409
    %v411 = vrot.slane %v410, 4
    %v412 = vadd.f32 %v410, %v411
    %v413 = vrot.slane %v412, 2
    %v414 = vadd.f32 %v412, %v413
    %v415 = vrot.slane %v414, 1
    %v416 = vadd.f32 %v414, %v415
    %v417 = vmul.f32 %v407, 0.0625
    %v418 = vmul.f32 %v416, 0.0625
    %v419 = vmul.f32 %v417, %v417
    %v420 = vsub.f32 %v418, %v419
    %v421 = vadd.f32 %v420, 1e-05
    %v422 = vrsqrt.pop %v421
    %v423 = vmul.f32 %v398, %v422
    %v424 = vmul.f32 %v417, %v423
    %v425 = vsub.f32 %v400, %v424
    %v427 = vlaneseq
    %v428 = vshrl.u32 %v427, 7
    %v429 = vsub.s32 0, %v428
    %v430 = vrot.slane %v423, %v429
    %v432 = vmul.f32 %v391, %v430
    %v433 = vmul.f32 %v394, %v430
    %v435 = vlaneseq
    %v436 = vshrl.u32 %v435, 7
    %v437 = vsub.s32 0, %v436
    %v438 = vrot.slane %v425, %v437
    %v440 = vadd.f32 %v432, %v438
    %v441 = vadd.f32 %v433, %v438
    %v442 = vmax.f32 %v440, 0.0
    %v443 = vmax.f32 %v441, 0.0
    %v444 = vpack.c.bf16 %v443, %v442
    %s445 = scalar_lea.vmem [#allocation2], 128
    %v446 = vld [vmem:[%s445] sm:$0xf]
    %v447 = vld [vmem:[%s445 + $0x4] sm:$0xf]
    %v448 = vld [vmem:[%s445 + $0x8] sm:$0xf]
    %v449 = vld [vmem:[%s445 + $0xc] sm:$0xf]
    %v450 = vld [vmem:[%s445 + $0x10] sm:$0xf]
    %v451 = vld [vmem:[%s445 + $0x14] sm:$0xf]
    %v452 = vld [vmem:[%s445 + $0x18] sm:$0xf]
    %v453 = vld [vmem:[%s445 + $0x1c] sm:$0xf]
    %v454 = vld [vmem:[%s445 + $0x20] sm:$0xf]
    %v455 = vld [vmem:[%s445 + $0x24] sm:$0xf]
    %v456 = vld [vmem:[%s445 + $0x28] sm:$0xf]
    %v457 = vld [vmem:[%s445 + $0x2c] sm:$0xf]
    %v458 = vld [vmem:[%s445 + $0x30] sm:$0xf]
    %v459 = vld [vmem:[%s445 + $0x34] sm:$0xf]
    %v460 = vld [vmem:[%s445 + $0x38] sm:$0xf]
    %v461 = vld [vmem:[%s445 + $0x3c] sm:$0xf]
    %v478 = vunpack.c.l.b16 %v446
    %v479 = vunpack.c.l.b16 %v447
    %v480 = vunpack.c.l.b16 %v448
    %v481 = vunpack.c.l.b16 %v449
    %v482 = vunpack.c.l.b16 %v450
    %v483 = vunpack.c.l.b16 %v451
    %v484 = vunpack.c.l.b16 %v452
    %v485 = vunpack.c.l.b16 %v453
    %v486 = vunpack.c.l.b16 %v454
    %v487 = vunpack.c.l.b16 %v455
    %v488 = vunpack.c.l.b16 %v456
    %v489 = vunpack.c.l.b16 %v457
    %v490 = vunpack.c.l.b16 %v458
    %v491 = vunpack.c.l.b16 %v459
    %v492 = vunpack.c.l.b16 %v460
    %v493 = vunpack.c.l.b16 %v461
    %v494 = vpack.c.b16 %v479, %v478
    %v495 = vpack.c.b16 %v481, %v480
    %v496 = vpack.c.b16 %v483, %v482
    %v497 = vpack.c.b16 %v485, %v484
    %v498 = vpack.c.b16 %v487, %v486
    %v499 = vpack.c.b16 %v489, %v488
    %v500 = vpack.c.b16 %v491, %v490
    %v501 = vpack.c.b16 %v493, %v492
    %510 = vmatprep.subr.bf16.mxu0 0
    %511 = vmatpush1.bf16.msra.mxu0 %v494
    %512 = vmatprep.subr.bf16.mxu0 0
    %513 = vmatpush1.bf16.msra.mxu0 %v495
    %514 = vmatprep.subr.bf16.mxu0 0
    %515 = vmatpush1.bf16.msra.mxu0 %v496
    %516 = vmatprep.subr.bf16.mxu0 0
    %517 = vmatpush1.bf16.msra.mxu0 %v497
    %518 = vmatprep.subr.bf16.mxu0 0
    %519 = vmatpush1.bf16.msra.mxu0 %v498
    %520 = vmatprep.subr.bf16.mxu0 0
    %521 = vmatpush1.bf16.msra.mxu0 %v499
    %522 = vmatprep.subr.bf16.mxu0 0
    %523 = vmatpush1.bf16.msra.mxu0 %v500
    %524 = vmatprep.subr.bf16.mxu0 0
    %525 = vmatpush1.bf16.msra.mxu0 %v501
    %526 = vmatprep.subr.bf16.mxu0 0
    %527 = vmatpush1.bf16.msra.mxu0 0
    %528 = vmatprep.subr.bf16.mxu0 0
    %529 = vmatpush1.bf16.msra.mxu0 0
    %530 = vmatprep.subr.bf16.mxu0 0
    %531 = vmatpush1.bf16.msra.mxu0 0
    %532 = vmatprep.subr.bf16.mxu0 0
    %533 = vmatpush1.bf16.msra.mxu0 0
    %534 = vmatprep.subr.bf16.mxu0 0
    %535 = vmatpush1.bf16.msra.mxu0 0
    %536 = vmatprep.subr.bf16.mxu0 0
    %537 = vmatpush1.bf16.msra.mxu0 0
    %538 = vmatprep.subr.bf16.mxu0 0
    %539 = vmatpush1.bf16.msra.mxu0 0
    %540 = vmatprep.subr.bf16.mxu0 0
    %541 = vmatpush1.bf16.msra.mxu0 0
    %542 = vmatprep.mubr.bf16.mxu0 0
    %543 = vmatmul.mubr.bf16.gmra.mrb[0].mxu0 %v444
    %v544 = vpop.f32.mrb[0].mxu0
    %v545 = vadd.f32 0.0, %v544
    %v546 = vpop.f32.mrb[0].mxu0
    %v547 = vpop.f32.mrb[0].mxu0
    %v548 = vadd.f32 0.0, %v547
    %v549 = vpop.f32.mrb[0].mxu0
    %550 = vdwg.mxu0
    %s551 = scalar_lea.vmem %s3, 3
    %v552 = vld [vmem:[%s551] sm:$0x1]
    %s553 = scalar_lea.vmem %s4, 3
    %v554 = vld [vmem:[%s553] sm:$0x1]
    %v555 = vadd.f32 %v545, %v548
    %v556 = vrot.slane %v555, 4
    %v557 = vadd.f32 %v555, %v556
    %v558 = vrot.slane %v557, 2
    %v559 = vadd.f32 %v557, %v558
    %v560 = vrot.slane %v559, 1
    %v561 = vadd.f32 %v559, %v560
    %v562 = vmul.f32 %v545, %v545
    %v563 = vmul.f32 %v548, %v548
    %v564 = vadd.f32 %v562, %v563
    %v565 = vrot.slane %v564, 4
    %v566 = vadd.f32 %v564, %v565
    %v567 = vrot.slane %v566, 2
    %v568 = vadd.f32 %v566, %v567
    %v569 = vrot.slane %v568, 1
    %v570 = vadd.f32 %v568, %v569
    %v571 = vmul.f32 %v561, 0.0625
    %v572 = vmul.f32 %v570, 0.0625
    %v573 = vmul.f32 %v571, %v571
    %v574 = vsub.f32 %v572, %v573
    %v575 = vadd.f32 %v574, 1e-05
    %v576 = vrsqrt.pop %v575
    %v577 = vmul.f32 %v552, %v576
    %v578 = vmul.f32 %v571, %v577
    %v579 = vsub.f32 %v554, %v578
    %v581 = vlaneseq
    %v582 = vshrl.u32 %v581, 7
    %v583 = vsub.s32 0, %v582
    %v584 = vrot.slane %v577, %v583
    %v586 = vmul.f32 %v545, %v584
    %v587 = vmul.f32 %v548, %v584
    %v589 = vlaneseq
    %v590 = vshrl.u32 %v589, 7
    %v591 = vsub.s32 0, %v590
    %v592 = vrot.slane %v579, %v591
    %v594 = vadd.f32 %v586, %v592
    %v595 = vadd.f32 %v587, %v592
    %v596 = vmax.f32 %v594, 0.0
    %v597 = vmax.f32 %v595, 0.0
    %v598 = vpack.c.bf16 %v597, %v596
    %s599 = scalar_lea.vmem [#allocation2], 192
    %v600 = vld [vmem:[%s599] sm:$0xf]
    %v601 = vld [vmem:[%s599 + $0x4] sm:$0xf]
    %v602 = vld [vmem:[%s599 + $0x8] sm:$0xf]
    %v603 = vld [vmem:[%s599 + $0xc] sm:$0xf]
    %v604 = vld [vmem:[%s599 + $0x10] sm:$0xf]
    %v605 = vld [vmem:[%s599 + $0x14] sm:$0xf]
    %v606 = vld [vmem:[%s599 + $0x18] sm:$0xf]
    %v607 = vld [vmem:[%s599 + $0x1c] sm:$0xf]
    %v608 = vld [vmem:[%s599 + $0x20] sm:$0xf]
    %v609 = vld [vmem:[%s599 + $0x24] sm:$0xf]
    %v610 = vld [vmem:[%s599 + $0x28] sm:$0xf]
    %v611 = vld [vmem:[%s599 + $0x2c] sm:$0xf]
    %v612 = vld [vmem:[%s599 + $0x30] sm:$0xf]
    %v613 = vld [vmem:[%s599 + $0x34] sm:$0xf]
    %v614 = vld [vmem:[%s599 + $0x38] sm:$0xf]
    %v615 = vld [vmem:[%s599 + $0x3c] sm:$0xf]
    %v632 = vunpack.c.l.b16 %v600
    %v633 = vunpack.c.l.b16 %v601
    %v634 = vunpack.c.l.b16 %v602
    %v635 = vunpack.c.l.b16 %v603
    %v636 = vunpack.c.l.b16 %v604
    %v637 = vunpack.c.l.b16 %v605
    %v638 = vunpack.c.l.b16 %v606
    %v639 = vunpack.c.l.b16 %v607
    %v640 = vunpack.c.l.b16 %v608
    %v641 = vunpack.c.l.b16 %v609
    %v642 = vunpack.c.l.b16 %v610
    %v643 = vunpack.c.l.b16 %v611
    %v644 = vunpack.c.l.b16 %v612
    %v645 = vunpack.c.l.b16 %v613
    %v646 = vunpack.c.l.b16 %v614
    %v647 = vunpack.c.l.b16 %v615
    %v648 = vpack.c.b16 %v633, %v632
    %v649 = vpack.c.b16 %v635, %v634
    %v650 = vpack.c.b16 %v637, %v636
    %v651 = vpack.c.b16 %v639, %v638
    %v652 = vpack.c.b16 %v641, %v640
    %v653 = vpack.c.b16 %v643, %v642
    %v654 = vpack.c.b16 %v645, %v644
    %v655 = vpack.c.b16 %v647, %v646
    %664 = vmatprep.subr.bf16.mxu0 0
    %665 = vmatpush1.bf16.msra.mxu0 %v648
    %666 = vmatprep.subr.bf16.mxu0 0
    %667 = vmatpush1.bf16.msra.mxu0 %v649
    %668 = vmatprep.subr.bf16.mxu0 0
    %669 = vmatpush1.bf16.msra.mxu0 %v650
    %670 = vmatprep.subr.bf16.mxu0 0
    %671 = vmatpush1.bf16.msra.mxu0 %v651
    %672 = vmatprep.subr.bf16.mxu0 0
    %673 = vmatpush1.bf16.msra.mxu0 %v652
    %674 = vmatprep.subr.bf16.mxu0 0
    %675 = vmatpush1.bf16.msra.mxu0 %v653
    %676 = vmatprep.subr.bf16.mxu0 0
    %677 = vmatpush1.bf16.msra.mxu0 %v654
    %678 = vmatprep.subr.bf16.mxu0 0
    %679 = vmatpush1.bf16.msra.mxu0 %v655
    %680 = vmatprep.subr.bf16.mxu0 0
    %681 = vmatpush1.bf16.msra.mxu0 0
    %682 = vmatprep.subr.bf16.mxu0 0
    %683 = vmatpush1.bf16.msra.mxu0 0
    %684 = vmatprep.subr.bf16.mxu0 0
    %685 = vmatpush1.bf16.msra.mxu0 0
    %686 = vmatprep.subr.bf16.mxu0 0
    %687 = vmatpush1.bf16.msra.mxu0 0
    %688 = vmatprep.subr.bf16.mxu0 0
    %689 = vmatpush1.bf16.msra.mxu0 0
    %690 = vmatprep.subr.bf16.mxu0 0
    %691 = vmatpush1.bf16.msra.mxu0 0
    %692 = vmatprep.subr.bf16.mxu0 0
    %693 = vmatpush1.bf16.msra.mxu0 0
    %694 = vmatprep.subr.bf16.mxu0 0
    %695 = vmatpush1.bf16.msra.mxu0 0
    %696 = vmatprep.mubr.bf16.mxu0 0
    %697 = vmatmul.mubr.bf16.gmra.mrb[0].mxu0 %v598
    %v698 = vpop.f32.mrb[0].mxu0
    %v699 = vadd.f32 0.0, %v698
    %v700 = vpop.f32.mrb[0].mxu0
    %v701 = vpop.f32.mrb[0].mxu0
    %v702 = vadd.f32 0.0, %v701
    %v703 = vpop.f32.mrb[0].mxu0
    %704 = vdwg.mxu0
    %s705 = scalar_lea.vmem %s3, 4
    %v706 = vld [vmem:[%s705] sm:$0x1]
    %s707 = scalar_lea.vmem %s4, 4
    %v708 = vld [vmem:[%s707] sm:$0x1]
    %v709 = vadd.f32 %v699, %v702
    %v710 = vrot.slane %v709, 4
    %v711 = vadd.f32 %v709, %v710
    %v712 = vrot.slane %v711, 2
    %v713 = vadd.f32 %v711, %v712
    %v714 = vrot.slane %v713, 1
    %v715 = vadd.f32 %v713, %v714
    %v716 = vmul.f32 %v699, %v699
    %v717 = vmul.f32 %v702, %v702
    %v718 = vadd.f32 %v716, %v717
    %v719 = vrot.slane %v718, 4
    %v720 = vadd.f32 %v718, %v719
    %v721 = vrot.slane %v720, 2
    %v722 = vadd.f32 %v720, %v721
    %v723 = vrot.slane %v722, 1
    %v724 = vadd.f32 %v722, %v723
    %v725 = vmul.f32 %v715, 0.0625
    %v726 = vmul.f32 %v724, 0.0625
    %v727 = vmul.f32 %v725, %v725
    %v728 = vsub.f32 %v726, %v727
    %v729 = vadd.f32 %v728, 1e-05
    %v730 = vrsqrt.pop %v729
    %v731 = vmul.f32 %v706, %v730
    %v732 = vmul.f32 %v725, %v731
    %v733 = vsub.f32 %v708, %v732
    %v735 = vlaneseq
    %v736 = vshrl.u32 %v735, 7
    %v737 = vsub.s32 0, %v736
    %v738 = vrot.slane %v731, %v737
    %v740 = vmul.f32 %v699, %v738
    %v741 = vmul.f32 %v702, %v738
    %v743 = vlaneseq
    %v744 = vshrl.u32 %v743, 7
    %v745 = vsub.s32 0, %v744
    %v746 = vrot.slane %v733, %v745
    %v748 = vadd.f32 %v740, %v746
    %v749 = vadd.f32 %v741, %v746
    %v750 = vmax.f32 %v748, 0.0
    %v751 = vmax.f32 %v749, 0.0
    %v752 = vpack.c.bf16 %v751, %v750
    %s753 = scalar_lea.vmem [#allocation2], 256
    %v754 = vld [vmem:[%s753] sm:$0xf]
    %v755 = vld [vmem:[%s753 + $0x4] sm:$0xf]
    %v756 = vld [vmem:[%s753 + $0x8] sm:$0xf]
    %v757 = vld [vmem:[%s753 + $0xc] sm:$0xf]
    %v758 = vld [vmem:[%s753 + $0x10] sm:$0xf]
    %v759 = vld [vmem:[%s753 + $0x14] sm:$0xf]
    %v760 = vld [vmem:[%s753 + $0x18] sm:$0xf]
    %v761 = vld [vmem:[%s753 + $0x1c] sm:$0xf]
    %v762 = vld [vmem:[%s753 + $0x20] sm:$0xf]
    %v763 = vld [vmem:[%s753 + $0x24] sm:$0xf]
    %v764 = vld [vmem:[%s753 + $0x28] sm:$0xf]
    %v765 = vld [vmem:[%s753 + $0x2c] sm:$0xf]
    %v766 = vld [vmem:[%s753 + $0x30] sm:$0xf]
    %v767 = vld [vmem:[%s753 + $0x34] sm:$0xf]
    %v768 = vld [vmem:[%s753 + $0x38] sm:$0xf]
    %v769 = vld [vmem:[%s753 + $0x3c] sm:$0xf]
    %v786 = vunpack.c.l.b16 %v754
    %v787 = vunpack.c.l.b16 %v755
    %v788 = vunpack.c.l.b16 %v756
    %v789 = vunpack.c.l.b16 %v757
    %v790 = vunpack.c.l.b16 %v758
    %v791 = vunpack.c.l.b16 %v759
    %v792 = vunpack.c.l.b16 %v760
    %v793 = vunpack.c.l.b16 %v761
    %v794 = vunpack.c.l.b16 %v762
    %v795 = vunpack.c.l.b16 %v763
    %v796 = vunpack.c.l.b16 %v764
    %v797 = vunpack.c.l.b16 %v765
    %v798 = vunpack.c.l.b16 %v766
    %v799 = vunpack.c.l.b16 %v767
    %v800 = vunpack.c.l.b16 %v768
    %v801 = vunpack.c.l.b16 %v769
    %v802 = vpack.c.b16 %v787, %v786
    %v803 = vpack.c.b16 %v789, %v788
    %v804 = vpack.c.b16 %v791, %v790
    %v805 = vpack.c.b16 %v793, %v792
    %v806 = vpack.c.b16 %v795, %v794
    %v807 = vpack.c.b16 %v797, %v796
    %v808 = vpack.c.b16 %v799, %v798
    %v809 = vpack.c.b16 %v801, %v800
    %818 = vmatprep.subr.bf16.mxu0 0
    %819 = vmatpush1.bf16.msra.mxu0 %v802
    %820 = vmatprep.subr.bf16.mxu0 0
    %821 = vmatpush1.bf16.msra.mxu0 %v803
    %822 = vmatprep.subr.bf16.mxu0 0
    %823 = vmatpush1.bf16.msra.mxu0 %v804
    %824 = vmatprep.subr.bf16.mxu0 0
    %825 = vmatpush1.bf16.msra.mxu0 %v805
    %826 = vmatprep.subr.bf16.mxu0 0
    %827 = vmatpush1.bf16.msra.mxu0 %v806
    %828 = vmatprep.subr.bf16.mxu0 0
    %829 = vmatpush1.bf16.msra.mxu0 %v807
    %830 = vmatprep.subr.bf16.mxu0 0
    %831 = vmatpush1.bf16.msra.mxu0 %v808
    %832 = vmatprep.subr.bf16.mxu0 0
    %833 = vmatpush1.bf16.msra.mxu0 %v809
    %834 = vmatprep.subr.bf16.mxu0 0
    %835 = vmatpush1.bf16.msra.mxu0 0
    %836 = vmatprep.subr.bf16.mxu0 0
    %837 = vmatpush1.bf16.msra.mxu0 0
    %838 = vmatprep.subr.bf16.mxu0 0
    %839 = vmatpush1.bf16.msra.mxu0 0
    %840 = vmatprep.subr.bf16.mxu0 0
    %841 = vmatpush1.bf16.msra.mxu0 0
    %842 = vmatprep.subr.bf16.mxu0 0
    %843 = vmatpush1.bf16.msra.mxu0 0
    %844 = vmatprep.subr.bf16.mxu0 0
    %845 = vmatpush1.bf16.msra.mxu0 0
    %846 = vmatprep.subr.bf16.mxu0 0
    %847 = vmatpush1.bf16.msra.mxu0 0
    %848 = vmatprep.subr.bf16.mxu0 0
    %849 = vmatpush1.bf16.msra.mxu0 0
    %850 = vmatprep.mubr.bf16.mxu0 0
    %851 = vmatmul.mubr.bf16.gmra.mrb[0].mxu0 %v752
    %v852 = vpop.f32.mrb[0].mxu0
    %v853 = vadd.f32 0.0, %v852
    %v854 = vpop.f32.mrb[0].mxu0
    %v855 = vpop.f32.mrb[0].mxu0
    %v856 = vadd.f32 0.0, %v855
    %v857 = vpop.f32.mrb[0].mxu0
    %858 = vdwg.mxu0
    %s859 = scalar_lea.vmem %s3, 5
    %v860 = vld [vmem:[%s859] sm:$0x1]
    %s861 = scalar_lea.vmem %s4, 5
    %v862 = vld [vmem:[%s861] sm:$0x1]
    %v863 = vadd.f32 %v853, %v856
    %v864 = vrot.slane %v863, 4
    %v865 = vadd.f32 %v863, %v864
    %v866 = vrot.slane %v865, 2
    %v867 = vadd.f32 %v865, %v866
    %v868 = vrot.slane %v867, 1
    %v869 = vadd.f32 %v867, %v868
    %v870 = vmul.f32 %v853, %v853
    %v871 = vmul.f32 %v856, %v856
    %v872 = vadd.f32 %v870, %v871
    %v873 = vrot.slane %v872, 4
    %v874 = vadd.f32 %v872, %v873
    %v875 = vrot.slane %v874, 2
    %v876 = vadd.f32 %v874, %v875
    %v877 = vrot.slane %v876, 1
    %v878 = vadd.f32 %v876, %v877
    %v879 = vmul.f32 %v869, 0.0625
    %v880 = vmul.f32 %v878, 0.0625
    %v881 = vmul.f32 %v879, %v879
    %v882 = vsub.f32 %v880, %v881
    %v883 = vadd.f32 %v882, 1e-05
    %v884 = vrsqrt.pop %v883
    %v885 = vmul.f32 %v860, %v884
    %v886 = vmul.f32 %v879, %v885
    %v887 = vsub.f32 %v862, %v886
    %v889 = vlaneseq
    %v890 = vshrl.u32 %v889, 7
    %v891 = vsub.s32 0, %v890
    %v892 = vrot.slane %v885, %v891
    %v894 = vmul.f32 %v853, %v892
    %v895 = vmul.f32 %v856, %v892
    %v897 = vlaneseq
    %v898 = vshrl.u32 %v897, 7
    %v899 = vsub.s32 0, %v898
    %v900 = vrot.slane %v887, %v899
    %v902 = vadd.f32 %v894, %v900
    %v903 = vadd.f32 %v895, %v900
    %v904 = vmax.f32 %v902, 0.0
    %v905 = vmax.f32 %v903, 0.0
    %v906 = vpack.c.bf16 %v905, %v904
    %s907 = scalar_lea.vmem [#allocation2], 320
    %v908 = vld [vmem:[%s907] sm:$0xf]
    %v909 = vld [vmem:[%s907 + $0x4] sm:$0xf]
    %v910 = vld [vmem:[%s907 + $0x8] sm:$0xf]
    %v911 = vld [vmem:[%s907 + $0xc] sm:$0xf]
    %v912 = vld [vmem:[%s907 + $0x10] sm:$0xf]
    %v913 = vld [vmem:[%s907 + $0x14] sm:$0xf]
    %v914 = vld [vmem:[%s907 + $0x18] sm:$0xf]
    %v915 = vld [vmem:[%s907 + $0x1c] sm:$0xf]
    %v916 = vld [vmem:[%s907 + $0x20] sm:$0xf]
    %v917 = vld [vmem:[%s907 + $0x24] sm:$0xf]
    %v918 = vld [vmem:[%s907 + $0x28] sm:$0xf]
    %v919 = vld [vmem:[%s907 + $0x2c] sm:$0xf]
    %v920 = vld [vmem:[%s907 + $0x30] sm:$0xf]
    %v921 = vld [vmem:[%s907 + $0x34] sm:$0xf]
    %v922 = vld [vmem:[%s907 + $0x38] sm:$0xf]
    %v923 = vld [vmem:[%s907 + $0x3c] sm:$0xf]
    %v940 = vunpack.c.l.b16 %v908
    %v941 = vunpack.c.l.b16 %v909
    %v942 = vunpack.c.l.b16 %v910
    %v943 = vunpack.c.l.b16 %v911
    %v944 = vunpack.c.l.b16 %v912
    %v945 = vunpack.c.l.b16 %v913
    %v946 = vunpack.c.l.b16 %v914
    %v947 = vunpack.c.l.b16 %v915
    %v948 = vunpack.c.l.b16 %v916
    %v949 = vunpack.c.l.b16 %v917
    %v950 = vunpack.c.l.b16 %v918
    %v951 = vunpack.c.l.b16 %v919
    %v952 = vunpack.c.l.b16 %v920
    %v953 = vunpack.c.l.b16 %v921
    %v954 = vunpack.c.l.b16 %v922
    %v955 = vunpack.c.l.b16 %v923
    %v956 = vpack.c.b16 %v941, %v940
    %v957 = vpack.c.b16 %v943, %v942
    %v958 = vpack.c.b16 %v945, %v944
    %v959 = vpack.c.b16 %v947, %v946
    %v960 = vpack.c.b16 %v949, %v948
    %v961 = vpack.c.b16 %v951, %v950
    %v962 = vpack.c.b16 %v953, %v952
    %v963 = vpack.c.b16 %v955, %v954
    %972 = vmatprep.subr.bf16.mxu0 0
    %973 = vmatpush1.bf16.msra.mxu0 %v956
    %974 = vmatprep.subr.bf16.mxu0 0
    %975 = vmatpush1.bf16.msra.mxu0 %v957
    %976 = vmatprep.subr.bf16.mxu0 0
    %977 = vmatpush1.bf16.msra.mxu0 %v958
    %978 = vmatprep.subr.bf16.mxu0 0
    %979 = vmatpush1.bf16.msra.mxu0 %v959
    %980 = vmatprep.subr.bf16.mxu0 0
    %981 = vmatpush1.bf16.msra.mxu0 %v960
    %982 = vmatprep.subr.bf16.mxu0 0
    %983 = vmatpush1.bf16.msra.mxu0 %v961
    %984 = vmatprep.subr.bf16.mxu0 0
    %985 = vmatpush1.bf16.msra.mxu0 %v962
    %986 = vmatprep.subr.bf16.mxu0 0
    %987 = vmatpush1.bf16.msra.mxu0 %v963
    %988 = vmatprep.subr.bf16.mxu0 0
    %989 = vmatpush1.bf16.msra.mxu0 0
    %990 = vmatprep.subr.bf16.mxu0 0
    %991 = vmatpush1.bf16.msra.mxu0 0
    %992 = vmatprep.subr.bf16.mxu0 0
    %993 = vmatpush1.bf16.msra.mxu0 0
    %994 = vmatprep.subr.bf16.mxu0 0
    %995 = vmatpush1.bf16.msra.mxu0 0
    %996 = vmatprep.subr.bf16.mxu0 0
    %997 = vmatpush1.bf16.msra.mxu0 0
    %998 = vmatprep.subr.bf16.mxu0 0
    %999 = vmatpush1.bf16.msra.mxu0 0
    %1000 = vmatprep.subr.bf16.mxu0 0
    %1001 = vmatpush1.bf16.msra.mxu0 0
    %1002 = vmatprep.subr.bf16.mxu0 0
    %1003 = vmatpush1.bf16.msra.mxu0 0
    %1004 = vmatprep.mubr.bf16.mxu0 0
    %1005 = vmatmul.mubr.bf16.gmra.mrb[0].mxu0 %v906
    %v1006 = vpop.f32.mrb[0].mxu0
    %v1007 = vadd.f32 0.0, %v1006
    %v1008 = vpop.f32.mrb[0].mxu0
    %v1009 = vpop.f32.mrb[0].mxu0
    %v1010 = vadd.f32 0.0, %v1009
    %v1011 = vpop.f32.mrb[0].mxu0
    %1012 = vdwg.mxu0
    %s1013 = scalar_lea.vmem %s3, 6
    %v1014 = vld [vmem:[%s1013] sm:$0x1]
    %s1015 = scalar_lea.vmem %s4, 6
    %v1016 = vld [vmem:[%s1015] sm:$0x1]
    %v1017 = vadd.f32 %v1007, %v1010
    %v1018 = vrot.slane %v1017, 4
    %v1019 = vadd.f32 %v1017, %v1018
    %v1020 = vrot.slane %v1019, 2
    %v1021 = vadd.f32 %v1019, %v1020
    %v1022 = vrot.slane %v1021, 1
    %v1023 = vadd.f32 %v1021, %v1022
    %v1024 = vmul.f32 %v1007, %v1007
    %v1025 = vmul.f32 %v1010, %v1010
    %v1026 = vadd.f32 %v1024, %v1025
    %v1027 = vrot.slane %v1026, 4
    %v1028 = vadd.f32 %v1026, %v1027
    %v1029 = vrot.slane %v1028, 2
    %v1030 = vadd.f32 %v1028, %v1029
    %v1031 = vrot.slane %v1030, 1
    %v1032 = vadd.f32 %v1030, %v1031
    %v1033 = vmul.f32 %v1023, 0.0625
    %v1034 = vmul.f32 %v1032, 0.0625
    %v1035 = vmul.f32 %v1033, %v1033
    %v1036 = vsub.f32 %v1034, %v1035
    %v1037 = vadd.f32 %v1036, 1e-05
    %v1038 = vrsqrt.pop %v1037
    %v1039 = vmul.f32 %v1014, %v1038
    %v1040 = vmul.f32 %v1033, %v1039
    %v1041 = vsub.f32 %v1016, %v1040
    %v1043 = vlaneseq
    %v1044 = vshrl.u32 %v1043, 7
    %v1045 = vsub.s32 0, %v1044
    %v1046 = vrot.slane %v1039, %v1045
    %v1048 = vmul.f32 %v1007, %v1046
    %v1049 = vmul.f32 %v1010, %v1046
    %v1051 = vlaneseq
    %v1052 = vshrl.u32 %v1051, 7
    %v1053 = vsub.s32 0, %v1052
    %v1054 = vrot.slane %v1041, %v1053
    %v1056 = vadd.f32 %v1048, %v1054
    %v1057 = vadd.f32 %v1049, %v1054
    %v1058 = vmax.f32 %v1056, 0.0
    %v1059 = vmax.f32 %v1057, 0.0
    %v1060 = vpack.c.bf16 %v1059, %v1058
    %s1061 = scalar_lea.vmem [#allocation2], 384
    %v1062 = vld [vmem:[%s1061] sm:$0xf]
    %v1063 = vld [vmem:[%s1061 + $0x4] sm:$0xf]
    %v1064 = vld [vmem:[%s1061 + $0x8] sm:$0xf]
    %v1065 = vld [vmem:[%s1061 + $0xc] sm:$0xf]
    %v1066 = vld [vmem:[%s1061 + $0x10] sm:$0xf]
    %v1067 = vld [vmem:[%s1061 + $0x14] sm:$0xf]
    %v1068 = vld [vmem:[%s1061 + $0x18] sm:$0xf]
    %v1069 = vld [vmem:[%s1061 + $0x1c] sm:$0xf]
    %v1070 = vld [vmem:[%s1061 + $0x20] sm:$0xf]
    %v1071 = vld [vmem:[%s1061 + $0x24] sm:$0xf]
    %v1072 = vld [vmem:[%s1061 + $0x28] sm:$0xf]
    %v1073 = vld [vmem:[%s1061 + $0x2c] sm:$0xf]
    %v1074 = vld [vmem:[%s1061 + $0x30] sm:$0xf]
    %v1075 = vld [vmem:[%s1061 + $0x34] sm:$0xf]
    %v1076 = vld [vmem:[%s1061 + $0x38] sm:$0xf]
    %v1077 = vld [vmem:[%s1061 + $0x3c] sm:$0xf]
    %v1094 = vunpack.c.l.b16 %v1062
    %v1095 = vunpack.c.l.b16 %v1063
    %v1096 = vunpack.c.l.b16 %v1064
    %v1097 = vunpack.c.l.b16 %v1065
    %v1098 = vunpack.c.l.b16 %v1066
    %v1099 = vunpack.c.l.b16 %v1067
    %v1100 = vunpack.c.l.b16 %v1068
    %v1101 = vunpack.c.l.b16 %v1069
    %v1102 = vunpack.c.l.b16 %v1070
    %v1103 = vunpack.c.l.b16 %v1071
    %v1104 = vunpack.c.l.b16 %v1072
    %v1105 = vunpack.c.l.b16 %v1073
    %v1106 = vunpack.c.l.b16 %v1074
    %v1107 = vunpack.c.l.b16 %v1075
    %v1108 = vunpack.c.l.b16 %v1076
    %v1109 = vunpack.c.l.b16 %v1077
    %v1110 = vpack.c.b16 %v1095, %v1094
    %v1111 = vpack.c.b16 %v1097, %v1096
    %v1112 = vpack.c.b16 %v1099, %v1098
    %v1113 = vpack.c.b16 %v1101, %v1100
    %v1114 = vpack.c.b16 %v1103, %v1102
    %v1115 = vpack.c.b16 %v1105, %v1104
    %v1116 = vpack.c.b16 %v1107, %v1106
    %v1117 = vpack.c.b16 %v1109, %v1108
    %1126 = vmatprep.subr.bf16.mxu0 0
    %1127 = vmatpush1.bf16.msra.mxu0 %v1110
    %1128 = vmatprep.subr.bf16.mxu0 0
    %1129 = vmatpush1.bf16.msra.mxu0 %v1111
    %1130 = vmatprep.subr.bf16.mxu0 0
    %1131 = vmatpush1.bf16.msra.mxu0 %v1112
    %1132 = vmatprep.subr.bf16.mxu0 0
    %1133 = vmatpush1.bf16.msra.mxu0 %v1113
    %1134 = vmatprep.subr.bf16.mxu0 0
    %1135 = vmatpush1.bf16.msra.mxu0 %v1114
    %1136 = vmatprep.subr.bf16.mxu0 0
    %1137 = vmatpush1.bf16.msra.mxu0 %v1115
    %1138 = vmatprep.subr.bf16.mxu0 0
    %1139 = vmatpush1.bf16.msra.mxu0 %v1116
    %1140 = vmatprep.subr.bf16.mxu0 0
    %1141 = vmatpush1.bf16.msra.mxu0 %v1117
    %1142 = vmatprep.subr.bf16.mxu0 0
    %1143 = vmatpush1.bf16.msra.mxu0 0
    %1144 = vmatprep.subr.bf16.mxu0 0
    %1145 = vmatpush1.bf16.msra.mxu0 0
    %1146 = vmatprep.subr.bf16.mxu0 0
    %1147 = vmatpush1.bf16.msra.mxu0 0
    %1148 = vmatprep.subr.bf16.mxu0 0
    %1149 = vmatpush1.bf16.msra.mxu0 0
    %1150 = vmatprep.subr.bf16.mxu0 0
    %1151 = vmatpush1.bf16.msra.mxu0 0
    %1152 = vmatprep.subr.bf16.mxu0 0
    %1153 = vmatpush1.bf16.msra.mxu0 0
    %1154 = vmatprep.subr.bf16.mxu0 0
    %1155 = vmatpush1.bf16.msra.mxu0 0
    %1156 = vmatprep.subr.bf16.mxu0 0
    %1157 = vmatpush1.bf16.msra.mxu0 0
    %1158 = vmatprep.mubr.bf16.mxu0 0
    %1159 = vmatmul.mubr.bf16.gmra.mrb[0].mxu0 %v1060
    %v1160 = vpop.f32.mrb[0].mxu0
    %v1161 = vadd.f32 0.0, %v1160
    %v1162 = vpop.f32.mrb[0].mxu0
    %v1163 = vpop.f32.mrb[0].mxu0
    %v1164 = vadd.f32 0.0, %v1163
    %v1165 = vpop.f32.mrb[0].mxu0
    %1166 = vdwg.mxu0
    %s1167 = scalar_lea.vmem %s3, 7
    %v1168 = vld [vmem:[%s1167] sm:$0x1]
    %s1169 = scalar_lea.vmem %s4, 7
    %v1170 = vld [vmem:[%s1169] sm:$0x1]
    %v1171 = vadd.f32 %v1161, %v1164
    %v1172 = vrot.slane %v1171, 4
    %v1173 = vadd.f32 %v1171, %v1172
    %v1174 = vrot.slane %v1173, 2
    %v1175 = vadd.f32 %v1173, %v1174
    %v1176 = vrot.slane %v1175, 1
    %v1177 = vadd.f32 %v1175, %v1176
    %v1178 = vmul.f32 %v1161, %v1161
    %v1179 = vmul.f32 %v1164, %v1164
    %v1180 = vadd.f32 %v1178, %v1179
    %v1181 = vrot.slane %v1180, 4
    %v1182 = vadd.f32 %v1180, %v1181
    %v1183 = vrot.slane %v1182, 2
    %v1184 = vadd.f32 %v1182, %v1183
    %v1185 = vrot.slane %v1184, 1
    %v1186 = vadd.f32 %v1184, %v1185
    %v1187 = vmul.f32 %v1177, 0.0625
    %v1188 = vmul.f32 %v1186, 0.0625
    %v1189 = vmul.f32 %v1187, %v1187
    %v1190 = vsub.f32 %v1188, %v1189
    %v1191 = vadd.f32 %v1190, 1e-05
    %v1192 = vrsqrt.pop %v1191
    %v1193 = vmul.f32 %v1168, %v1192
    %v1194 = vmul.f32 %v1187, %v1193
    %v1195 = vsub.f32 %v1170, %v1194
    %v1197 = vlaneseq
    %v1198 = vshrl.u32 %v1197, 7
    %v1199 = vsub.s32 0, %v1198
    %v1200 = vrot.slane %v1193, %v1199
    %v1202 = vmul.f32 %v1161, %v1200
    %v1203 = vmul.f32 %v1164, %v1200
    %v1205 = vlaneseq
    %v1206 = vshrl.u32 %v1205, 7
    %v1207 = vsub.s32 0, %v1206
    %v1208 = vrot.slane %v1195, %v1207
    %v1210 = vadd.f32 %v1202, %v1208
    %v1211 = vadd.f32 %v1203, %v1208
    %v1212 = vmax.f32 %v1210, 0.0
    %v1213 = vmax.f32 %v1211, 0.0
    %v1214 = vpack.c.bf16 %v1213, %v1212
    %s1215 = scalar_lea.vmem [#allocation2], 448
    %v1216 = vld [vmem:[%s1215] sm:$0xf]
    %v1217 = vld [vmem:[%s1215 + $0x4] sm:$0xf]
    %v1218 = vld [vmem:[%s1215 + $0x8] sm:$0xf]
    %v1219 = vld [vmem:[%s1215 + $0xc] sm:$0xf]
    %v1220 = vld [vmem:[%s1215 + $0x10] sm:$0xf]
    %v1221 = vld [vmem:[%s1215 + $0x14] sm:$0xf]
    %v1222 = vld [vmem:[%s1215 + $0x18] sm:$0xf]
    %v1223 = vld [vmem:[%s1215 + $0x1c] sm:$0xf]
    %v1224 = vld [vmem:[%s1215 + $0x20] sm:$0xf]
    %v1225 = vld [vmem:[%s1215 + $0x24] sm:$0xf]
    %v1226 = vld [vmem:[%s1215 + $0x28] sm:$0xf]
    %v1227 = vld [vmem:[%s1215 + $0x2c] sm:$0xf]
    %v1228 = vld [vmem:[%s1215 + $0x30] sm:$0xf]
    %v1229 = vld [vmem:[%s1215 + $0x34] sm:$0xf]
    %v1230 = vld [vmem:[%s1215 + $0x38] sm:$0xf]
    %v1231 = vld [vmem:[%s1215 + $0x3c] sm:$0xf]
    %v1248 = vunpack.c.l.b16 %v1216
    %v1249 = vunpack.c.l.b16 %v1217
    %v1250 = vunpack.c.l.b16 %v1218
    %v1251 = vunpack.c.l.b16 %v1219
    %v1252 = vunpack.c.l.b16 %v1220
    %v1253 = vunpack.c.l.b16 %v1221
    %v1254 = vunpack.c.l.b16 %v1222
    %v1255 = vunpack.c.l.b16 %v1223
    %v1256 = vunpack.c.l.b16 %v1224
    %v1257 = vunpack.c.l.b16 %v1225
    %v1258 = vunpack.c.l.b16 %v1226
    %v1259 = vunpack.c.l.b16 %v1227
    %v1260 = vunpack.c.l.b16 %v1228
    %v1261 = vunpack.c.l.b16 %v1229
    %v1262 = vunpack.c.l.b16 %v1230
    %v1263 = vunpack.c.l.b16 %v1231
    %v1264 = vpack.c.b16 %v1249, %v1248
    %v1265 = vpack.c.b16 %v1251, %v1250
    %v1266 = vpack.c.b16 %v1253, %v1252
    %v1267 = vpack.c.b16 %v1255, %v1254
    %v1268 = vpack.c.b16 %v1257, %v1256
    %v1269 = vpack.c.b16 %v1259, %v1258
    %v1270 = vpack.c.b16 %v1261, %v1260
    %v1271 = vpack.c.b16 %v1263, %v1262
    %1280 = vmatprep.subr.bf16.mxu0 0
    %1281 = vmatpush1.bf16.msra.mxu0 %v1264
    %1282 = vmatprep.subr.bf16.mxu0 0
    %1283 = vmatpush1.bf16.msra.mxu0 %v1265
    %1284 = vmatprep.subr.bf16.mxu0 0
    %1285 = vmatpush1.bf16.msra.mxu0 %v1266
    %1286 = vmatprep.subr.bf16.mxu0 0
    %1287 = vmatpush1.bf16.msra.mxu0 %v1267
    %1288 = vmatprep.subr.bf16.mxu0 0
    %1289 = vmatpush1.bf16.msra.mxu0 %v1268
    %1290 = vmatprep.subr.bf16.mxu0 0
    %1291 = vmatpush1.bf16.msra.mxu0 %v1269
    %1292 = vmatprep.subr.bf16.mxu0 0
    %1293 = vmatpush1.bf16.msra.mxu0 %v1270
    %1294 = vmatprep.subr.bf16.mxu0 0
    %1295 = vmatpush1.bf16.msra.mxu0 %v1271
    %1296 = vmatprep.subr.bf16.mxu0 0
    %1297 = vmatpush1.bf16.msra.mxu0 0
    %1298 = vmatprep.subr.bf16.mxu0 0
    %1299 = vmatpush1.bf16.msra.mxu0 0
    %1300 = vmatprep.subr.bf16.mxu0 0
    %1301 = vmatpush1.bf16.msra.mxu0 0
    %1302 = vmatprep.subr.bf16.mxu0 0
    %1303 = vmatpush1.bf16.msra.mxu0 0
    %1304 = vmatprep.subr.bf16.mxu0 0
    %1305 = vmatpush1.bf16.msra.mxu0 0
    %1306 = vmatprep.subr.bf16.mxu0 0
    %1307 = vmatpush1.bf16.msra.mxu0 0
    %1308 = vmatprep.subr.bf16.mxu0 0
    %1309 = vmatpush1.bf16.msra.mxu0 0
    %1310 = vmatprep.subr.bf16.mxu0 0
    %1311 = vmatpush1.bf16.msra.mxu0 0
    %1312 = vmatprep.mubr.bf16.mxu0 0
    %1313 = vmatmul.mubr.bf16.gmra.mrb[0].mxu0 %v1214
    %v1314 = vpop.f32.mrb[0].mxu0
    %v1315 = vadd.f32 0.0, %v1314
    %v1316 = vpop.f32.mrb[0].mxu0
    %v1317 = vpop.f32.mrb[0].mxu0
    %v1318 = vadd.f32 0.0, %v1317
    %v1319 = vpop.f32.mrb[0].mxu0
    %1320 = vdwg.mxu0
    %s1321 = scalar_lea.vmem %s3, 8
    %v1322 = vld [vmem:[%s1321] sm:$0x1]
    %s1323 = scalar_lea.vmem %s4, 8
    %v1324 = vld [vmem:[%s1323] sm:$0x1]
    %v1325 = vadd.f32 %v1315, %v1318
    %v1326 = vrot.slane %v1325, 4
    %v1327 = vadd.f32 %v1325, %v1326
    %v1328 = vrot.slane %v1327, 2
    %v1329 = vadd.f32 %v1327, %v1328
    %v1330 = vrot.slane %v1329, 1
    %v1331 = vadd.f32 %v1329, %v1330
    %v1332 = vmul.f32 %v1315, %v1315
    %v1333 = vmul.f32 %v1318, %v1318
    %v1334 = vadd.f32 %v1332, %v1333
    %v1335 = vrot.slane %v1334, 4
    %v1336 = vadd.f32 %v1334, %v1335
    %v1337 = vrot.slane %v1336, 2
    %v1338 = vadd.f32 %v1336, %v1337
    %v1339 = vrot.slane %v1338, 1
    %v1340 = vadd.f32 %v1338, %v1339
    %v1341 = vmul.f32 %v1331, 0.0625
    %v1342 = vmul.f32 %v1340, 0.0625
    %v1343 = vmul.f32 %v1341, %v1341
    %v1344 = vsub.f32 %v1342, %v1343
    %v1345 = vadd.f32 %v1344, 1e-05
    %v1346 = vrsqrt.pop %v1345
    %v1347 = vmul.f32 %v1322, %v1346
    %v1348 = vmul.f32 %v1341, %v1347
    %v1349 = vsub.f32 %v1324, %v1348
    %v1351 = vlaneseq
    %v1352 = vshrl.u32 %v1351, 7
    %v1353 = vsub.s32 0, %v1352
    %v1354 = vrot.slane %v1347, %v1353
    %v1356 = vmul.f32 %v1315, %v1354
    %v1357 = vmul.f32 %v1318, %v1354
    %v1359 = vlaneseq
    %v1360 = vshrl.u32 %v1359, 7
    %v1361 = vsub.s32 0, %v1360
    %v1362 = vrot.slane %v1349, %v1361
    %v1364 = vadd.f32 %v1356, %v1362
    %v1365 = vadd.f32 %v1357, %v1362
    %v1366 = vmax.f32 %v1364, 0.0
    %v1367 = vmax.f32 %v1365, 0.0
    %v1368 = vpack.c.bf16 %v1367, %v1366
    %s1369 = scalar_lea.vmem [#allocation2], 512
    %v1370 = vld [vmem:[%s1369] sm:$0xf]
    %v1371 = vld [vmem:[%s1369 + $0x4] sm:$0xf]
    %v1372 = vld [vmem:[%s1369 + $0x8] sm:$0xf]
    %v1373 = vld [vmem:[%s1369 + $0xc] sm:$0xf]
    %v1374 = vld [vmem:[%s1369 + $0x10] sm:$0xf]
    %v1375 = vld [vmem:[%s1369 + $0x14] sm:$0xf]
    %v1376 = vld [vmem:[%s1369 + $0x18] sm:$0xf]
    %v1377 = vld [vmem:[%s1369 + $0x1c] sm:$0xf]
    %v1378 = vld [vmem:[%s1369 + $0x20] sm:$0xf]
    %v1379 = vld [vmem:[%s1369 + $0x24] sm:$0xf]
    %v1380 = vld [vmem:[%s1369 + $0x28] sm:$0xf]
    %v1381 = vld [vmem:[%s1369 + $0x2c] sm:$0xf]
    %v1382 = vld [vmem:[%s1369 + $0x30] sm:$0xf]
    %v1383 = vld [vmem:[%s1369 + $0x34] sm:$0xf]
    %v1384 = vld [vmem:[%s1369 + $0x38] sm:$0xf]
    %v1385 = vld [vmem:[%s1369 + $0x3c] sm:$0xf]
    %v1402 = vunpack.c.l.b16 %v1370
    %v1403 = vunpack.c.l.b16 %v1371
    %v1404 = vunpack.c.l.b16 %v1372
    %v1405 = vunpack.c.l.b16 %v1373
    %v1406 = vunpack.c.l.b16 %v1374
    %v1407 = vunpack.c.l.b16 %v1375
    %v1408 = vunpack.c.l.b16 %v1376
    %v1409 = vunpack.c.l.b16 %v1377
    %v1410 = vunpack.c.l.b16 %v1378
    %v1411 = vunpack.c.l.b16 %v1379
    %v1412 = vunpack.c.l.b16 %v1380
    %v1413 = vunpack.c.l.b16 %v1381
    %v1414 = vunpack.c.l.b16 %v1382
    %v1415 = vunpack.c.l.b16 %v1383
    %v1416 = vunpack.c.l.b16 %v1384
    %v1417 = vunpack.c.l.b16 %v1385
    %v1418 = vpack.c.b16 %v1403, %v1402
    %v1419 = vpack.c.b16 %v1405, %v1404
    %v1420 = vpack.c.b16 %v1407, %v1406
    %v1421 = vpack.c.b16 %v1409, %v1408
    %v1422 = vpack.c.b16 %v1411, %v1410
    %v1423 = vpack.c.b16 %v1413, %v1412
    %v1424 = vpack.c.b16 %v1415, %v1414
    %v1425 = vpack.c.b16 %v1417, %v1416
    %1434 = vmatprep.subr.bf16.mxu0 0
    %1435 = vmatpush1.bf16.msra.mxu0 %v1418
    %1436 = vmatprep.subr.bf16.mxu0 0
    %1437 = vmatpush1.bf16.msra.mxu0 %v1419
    %1438 = vmatprep.subr.bf16.mxu0 0
    %1439 = vmatpush1.bf16.msra.mxu0 %v1420
    %1440 = vmatprep.subr.bf16.mxu0 0
    %1441 = vmatpush1.bf16.msra.mxu0 %v1421
    %1442 = vmatprep.subr.bf16.mxu0 0
    %1443 = vmatpush1.bf16.msra.mxu0 %v1422
    %1444 = vmatprep.subr.bf16.mxu0 0
    %1445 = vmatpush1.bf16.msra.mxu0 %v1423
    %1446 = vmatprep.subr.bf16.mxu0 0
    %1447 = vmatpush1.bf16.msra.mxu0 %v1424
    %1448 = vmatprep.subr.bf16.mxu0 0
    %1449 = vmatpush1.bf16.msra.mxu0 %v1425
    %1450 = vmatprep.subr.bf16.mxu0 0
    %1451 = vmatpush1.bf16.msra.mxu0 0
    %1452 = vmatprep.subr.bf16.mxu0 0
    %1453 = vmatpush1.bf16.msra.mxu0 0
    %1454 = vmatprep.subr.bf16.mxu0 0
    %1455 = vmatpush1.bf16.msra.mxu0 0
    %1456 = vmatprep.subr.bf16.mxu0 0
    %1457 = vmatpush1.bf16.msra.mxu0 0
    %1458 = vmatprep.subr.bf16.mxu0 0
    %1459 = vmatpush1.bf16.msra.mxu0 0
    %1460 = vmatprep.subr.bf16.mxu0 0
    %1461 = vmatpush1.bf16.msra.mxu0 0
    %1462 = vmatprep.subr.bf16.mxu0 0
    %1463 = vmatpush1.bf16.msra.mxu0 0
    %1464 = vmatprep.subr.bf16.mxu0 0
    %1465 = vmatpush1.bf16.msra.mxu0 0
    %1466 = vmatprep.mubr.bf16.mxu0 0
    %1467 = vmatmul.mubr.bf16.gmra.mrb[0].mxu0 %v1368
    %v1468 = vpop.f32.mrb[0].mxu0
    %v1469 = vadd.f32 0.0, %v1468
    %v1470 = vpop.f32.mrb[0].mxu0
    %v1471 = vpop.f32.mrb[0].mxu0
    %v1472 = vadd.f32 0.0, %v1471
    %v1473 = vpop.f32.mrb[0].mxu0
    %1474 = vdwg.mxu0
    %s1475 = scalar_lea.vmem %s3, 9
    %v1476 = vld [vmem:[%s1475] sm:$0x1]
    %s1477 = scalar_lea.vmem %s4, 9
    %v1478 = vld [vmem:[%s1477] sm:$0x1]
    %v1479 = vadd.f32 %v1469, %v1472
    %v1480 = vrot.slane %v1479, 4
    %v1481 = vadd.f32 %v1479, %v1480
    %v1482 = vrot.slane %v1481, 2
    %v1483 = vadd.f32 %v1481, %v1482
    %v1484 = vrot.slane %v1483, 1
    %v1485 = vadd.f32 %v1483, %v1484
    %v1486 = vmul.f32 %v1469, %v1469
    %v1487 = vmul.f32 %v1472, %v1472
    %v1488 = vadd.f32 %v1486, %v1487
    %v1489 = vrot.slane %v1488, 4
    %v1490 = vadd.f32 %v1488, %v1489
    %v1491 = vrot.slane %v1490, 2
    %v1492 = vadd.f32 %v1490, %v1491
    %v1493 = vrot.slane %v1492, 1
    %v1494 = vadd.f32 %v1492, %v1493
    %v1495 = vmul.f32 %v1485, 0.0625
    %v1496 = vmul.f32 %v1494, 0.0625
    %v1497 = vmul.f32 %v1495, %v1495
    %v1498 = vsub.f32 %v1496, %v1497
    %v1499 = vadd.f32 %v1498, 1e-05
    %v1500 = vrsqrt.pop %v1499
    %v1501 = vmul.f32 %v1476, %v1500
    %v1502 = vmul.f32 %v1495, %v1501
    %v1503 = vsub.f32 %v1478, %v1502
    %v1505 = vlaneseq
    %v1506 = vshrl.u32 %v1505, 7
    %v1507 = vsub.s32 0, %v1506
    %v1508 = vrot.slane %v1501, %v1507
    %v1510 = vmul.f32 %v1469, %v1508
    %v1511 = vmul.f32 %v1472, %v1508
    %v1513 = vlaneseq
    %v1514 = vshrl.u32 %v1513, 7
    %v1515 = vsub.s32 0, %v1514
    %v1516 = vrot.slane %v1503, %v1515
    %v1518 = vadd.f32 %v1510, %v1516
    %v1519 = vadd.f32 %v1511, %v1516
    %v1520 = vmax.f32 %v1518, 0.0
    %v1521 = vmax.f32 %v1519, 0.0
    %v1522 = vpack.c.bf16 %v1521, %v1520
    %v1523 = vld [vmem:[%s5] sm:$0xf]
    %v1524 = vld [vmem:[%s5 + $0x4] sm:$0xf]
    %v1525 = vld [vmem:[%s6] sm:$0xff]
    %v1526 = vld [vmem:[%s6 + $0x8] sm:$0xff]
    %1528 = vset.pattern.permute.xlu0 0
    %1529 = vperm.xlu0 %1528, %v1525
    %v1530 = vpop.permute.xlu0 %1529
    %1533 = vset.pattern.permute.xlu0 0
    %1534 = vperm.xlu0 %1533, %v1526
    %v1535 = vpop.permute.xlu0 %1534
    %v1539 = vunpack.c.l.b16 %v1523
    %v1540 = vunpack.c.l.b16 %v1524
    %v1541 = vpack.c.b16 %v1540, %v1539
    %1543 = vmatprep.subr.bf16.mxu0 0
    %1544 = vmatpush1.bf16.xpose.msra.mxu0 %v1522
    %1545 = vmatprep.subr.bf16.mxu0 0
    %1546 = vmatpush1.bf16.xpose.msra.mxu0 0
    %1547 = vmatprep.subr.bf16.mxu0 0
    %1548 = vmatpush1.bf16.xpose.msra.mxu0 0
    %1549 = vmatprep.subr.bf16.mxu0 0
    %1550 = vmatpush1.bf16.xpose.msra.mxu0 0
    %1551 = vmatprep.subr.bf16.mxu0 0
    %1552 = vmatpush1.bf16.xpose.msra.mxu0 0
    %1553 = vmatprep.subr.bf16.mxu0 0
    %1554 = vmatpush1.bf16.xpose.msra.mxu0 0
    %1555 = vmatprep.subr.bf16.mxu0 0
    %1556 = vmatpush1.bf16.xpose.msra.mxu0 0
    %1557 = vmatprep.subr.bf16.mxu0 0
    %1558 = vmatpush1.bf16.xpose.msra.mxu0 0
    %1559 = vmatprep.subr.bf16.mxu0 0
    %1560 = vmatpush1.bf16.xpose.msra.mxu0 0
    %1561 = vmatprep.subr.bf16.mxu0 0
    %1562 = vmatpush1.bf16.xpose.msra.mxu0 0
    %1563 = vmatprep.subr.bf16.mxu0 0
    %1564 = vmatpush1.bf16.xpose.msra.mxu0 0
    %1565 = vmatprep.subr.bf16.mxu0 0
    %1566 = vmatpush1.bf16.xpose.msra.mxu0 0
    %1567 = vmatprep.subr.bf16.mxu0 0
    %1568 = vmatpush1.bf16.xpose.msra.mxu0 0
    %1569 = vmatprep.subr.bf16.mxu0 0
    %1570 = vmatpush1.bf16.xpose.msra.mxu0 0
    %1571 = vmatprep.subr.bf16.mxu0 0
    %1572 = vmatpush1.bf16.xpose.msra.mxu0 0
    %1573 = vmatprep.subr.bf16.mxu0 0
    %1574 = vmatpush1.bf16.xpose.msra.mxu0 0
    %1575 = vmatprep.mubr.bf16.mxu0 0
    %1576 = vmatmul.mubr.bf16.gmra.mrb[0].mxu0 %v1541
    %v1577 = vpop.f32.mrb[0].mxu0
    %v1578 = vadd.f32 %v1530, %v1577
    %v1579 = vpop.f32.mrb[0].mxu0
    %v1580 = vpop.f32.mrb[0].mxu0
    %v1581 = vadd.f32 %v1535, %v1580
    %v1582 = vpop.f32.mrb[0].mxu0
    %1583 = vdwg.mxu0
    %vm1584 = vcmask 130048
    %1585 = vst.msk [vmem:[%s7] sm:$0xff] %vm1584, %v1578
    %1586 = vst.msk [vmem:[%s7 + $0x8] sm:$0xff] %vm1584, %v1581
    // Predicated region
    $region34: #{_forward_jit.1} parent=1 // pred_check
      _
    $region35: #{_forward_jit.1} parent=1 // pred_check_branch
      %1588 = sbr.rel (0) target = $region37
    $region36: #{_forward_jit.1} parent=1 // pred_region
      _
    $region37: #{_forward_jit.1} parent=1 // pred_fallthru
      _
    // Predicated region
    $region38: #{_forward_jit.1} parent=1 // pred_check
      _
    $region39: #{_forward_jit.1} parent=1 // pred_check_branch
      %1590 = sbr.rel (0) target = $region41
    $region40: #{_forward_jit.1} parent=1 // pred_region
      _
    $region41: #{_forward_jit.1} parent=1 // pred_fallthru
      _
    %1591 = vsyncpa [#allocation3], 1

</llo_original>
